<compile_context>
chip_gen: v6e
topology: v6e:2x2x1
jax: 0.10.0
libtpu: 0.0.40
codegen_flags: <defaults>
</compile_context>

<pallas_src>
import numpy as np

import jax
import jax.numpy as jnp
from jax import lax
from jax.experimental import pallas as pl
from jax.experimental.pallas import tpu as pltpu

# ---- tools.* constants (deterministic, consistent with the module) ----
NUM_PC = 12                 # pitch classes
HARMONY_UNIT_SPAN = 4       # frames pooled into one harmony unit
FEATURE_SIZE = NUM_PC * 2   # feature axis of x
CH_BLOCK = 16               # sublane-aligned channel block covering channels 0..11

assert NUM_PC <= CH_BLOCK and FEATURE_SIZE == 2 * NUM_PC


def _note_pc_kernel(x_ref, pool_ref, out_ref):
    """One (batch-tile, time-tile) per grid step.

    x_ref   : (Bt, CH_BLOCK, Lt)   only rows [:NUM_PC] are meaningful
    pool_ref: (SPAN*TSUB, TSUB)    0/1 block-diagonal pooling matrix, fetched once
    out_ref : (Bt, Tt, NUM_PC)     written directly in the module's output layout
    """
    Bt, CH, _ = x_ref.shape
    Tt = out_ref.shape[1]
    KSUB, TSUB = pool_ref.shape
    ns = Tt // TSUB

    pool = pool_ref[...]                                     # (KSUB, TSUB), <=256 KiB

    for j in range(ns):                                      # static unroll, ns <= 4
        # 128*SPAN-aligned lane slice of the input tile; (Bt,16)->Bt*16 rows is
        # layout-free because CH_BLOCK=16 is a multiple of the 8-sublane tile.
        xj = x_ref[:, :, j * KSUB:(j + 1) * KSUB].reshape(Bt * CH, KSUB)
        # One MXU matmul per sub-tile: (Bt*16, KSUB) @ (KSUB, TSUB) -> (Bt*16, TSUB).
        # HIGHEST precision keeps the f32 span-sum exact (pool entries are 0/1).
        pj = jnp.dot(xj, pool,
                     preferred_element_type=jnp.float32,
                     precision=lax.Precision.HIGHEST)
        for b in range(Bt):                                  # static unroll
            res = pj[b * CH:(b + 1) * CH, :]                 # (16, TSUB), 16-row aligned
            # Transpose the tiny per-batch result (not the input), slice the 12 wanted
            # pitch classes from it, and store straight into the (Bt, Tt, 12) block.
            out_ref[b, j * TSUB:(j + 1) * TSUB, :] = (
                res.T[:, :NUM_PC].astype(out_ref.dtype))


def _ceil_to(v, m):
    return -(-v // m) * m


def _plan_tiles(B, T):
    """Pick (Bp, Bt, Tp, Tt, TSUB): padded sizes, batch tile, time tile, sub-tile."""
    if T <= 128:
        Tp, Tt, TSUB = T, T, T                 # single tiny tile, tiny pool
    else:
        Tp = _ceil_to(T, 128)
        TSUB = 128
        if Tp <= 512:
            Tt = Tp
        else:
            Tt = 512 if Tp % 512 == 0 else (256 if Tp % 256 == 0 else 128)

    if B % 16 == 0:
        Bt = 16
    elif B % 8 == 0:
        Bt = 8
    elif B <= 16:
        Bt = B
    else:
        Bt = 8
    Bp = _ceil_to(B, Bt)
    return Bp, Bt, Tp, Tt, TSUB


def note_encoder_pc_forward(x):
    """x: (B, FEATURE_SIZE, L) float32, L divisible by HARMONY_UNIT_SPAN.

    Returns (active_note_embedding, inactive_note_embedding), each (B, T, NUM_PC).
    Both outputs are the same array (matches the PyTorch in-place/aliasing semantics).
    """
    B, F, L = x.shape
    assert F == FEATURE_SIZE
    assert L % HARMONY_UNIT_SPAN == 0
    T = L // HARMONY_UNIT_SPAN

    Bp, Bt, Tp, Tt, TSUB = _plan_tiles(B, T)
    Lt = Tt * HARMONY_UNIT_SPAN
    Lp = Tp * HARMONY_UNIT_SPAN

    if (Bp, Lp) != (B, L):
        # Zero padding is harmless for sum pooling; padded rows/frames are sliced off.
        x = jnp.pad(x, ((0, Bp - B), (0, 0), (0, Lp - L)))

    # Fixed block-diagonal pooling matrix: pool[l, t] = 1 iff l // SPAN == t.
    # At most (512, 128) f32 = 256 KiB; DMA'd once (constant index_map below).
    li = np.arange(HARMONY_UNIT_SPAN * TSUB)
    ti = np.arange(TSUB)
    pool = jnp.asarray((li[:, None] // HARMONY_UNIT_SPAN == ti[None, :]),
                       dtype=x.dtype)

    out = pl.pallas_call(
        _note_pc_kernel,
        out_shape=jax.ShapeDtypeStruct((Bp, Tp, NUM_PC), x.dtype),
        grid_spec=pltpu.PrefetchScalarGridSpec(
            num_scalar_prefetch=0,
            grid=(Bp // Bt, Tp // Tt),
            in_specs=[
                # Only channels 0..15 are DMA'd (16 is sublane-aligned); time axis is
                # tiled in Lt = SPAN*Tt chunks (Lt is a multiple of 128 or the full L).
                pl.BlockSpec((Bt, CH_BLOCK, Lt), lambda bi, ti_: (bi, 0, ti_)),
                # Grid-invariant pooling matrix: block index never changes, so the
                # pipeline fetches it exactly once instead of rebuilding it per step.
                pl.BlockSpec((HARMONY_UNIT_SPAN * TSUB, TSUB),
                             lambda bi, ti_: (0, 0)),
            ],
            out_specs=pl.BlockSpec((Bt, Tt, NUM_PC), lambda bi, ti_: (bi, ti_, 0)),
        ),
        compiler_params=pltpu.CompilerParams(
            dimension_semantics=("parallel", "parallel"),
            vmem_limit_bytes=32 * 1024 * 1024,
        ),
    )(x, pool)

    if (Bp, Tp) != (B, T):
        out = out[:B, :T, :]
    return out, out  # aliased, like the PyTorch module


def _reference_forward(x):
    """Pure-JAX mirror of the PyTorch forward, including the in-place flip/aliasing."""
    B, F, L = x.shape
    T = L // HARMONY_UNIT_SPAN
    xf = x.at[:, NUM_PC:, :].set(1.0 - x[:, NUM_PC:, :])      # in-place flip
    pooled = xf.reshape(B, F, T, HARMONY_UNIT_SPAN).sum(-1)   # (B, F, T)
    out = jnp.transpose(pooled, (0, 2, 1))[..., :NUM_PC]      # (B, T, NUM_PC)
    return out, out                                           # both alias -> identical


if __name__ == "__main__":
    key = jax.random.PRNGKey(0)
    B, T = 2, 128
    L = T * HARMONY_UNIT_SPAN                                 # 512
    x = jax.random.uniform(key, (B, FEATURE_SIZE, L), dtype=jnp.float32)

    active, inactive = note_encoder_pc_forward(x)
    jax.block_until_ready((active, inactive))

    ref_active, ref_inactive = _reference_forward(x)
    assert active.shape == (B, T, NUM_PC)
    assert inactive.shape == (B, T, NUM_PC)
    assert jnp.allclose(active, ref_active, atol=1e-4)
    assert jnp.allclose(inactive, ref_inactive, atol=1e-4)

    print("KERNEL_OK")
</pallas_src>

<mosaic_0001>
module attributes {stable_mosaic.version = 11 : i64} {
  func.func @_note_pc_kernel(%arg0: i32, %arg1: i32, %arg2: memref<2x16x512xf32, #tpu.memory_space<vmem>>, %arg3: memref<512x128xf32, #tpu.memory_space<vmem>>, %arg4: memref<2x128x12xf32, #tpu.memory_space<vmem>>) attributes {dimension_semantics = [#tpu.dimension_semantics<parallel>, #tpu.dimension_semantics<parallel>], iteration_bounds = array<i64: 1, 1>, scalar_prefetch = 0 : i64, scratch_operands = 0 : i64, tpu.core_type = #tpu.core_type<tc>, window_params = [{transform_indices = @transform_0, window_bounds = array<i64: 2, 16, 512>}, {pipeline_mode = #tpu.pipeline_mode<synchronous>, transform_indices = @transform_1, window_bounds = array<i64: 512, 128>}, {transform_indices = @transform_2, window_bounds = array<i64: 2, 128, 12>}]} {
    %c0 = arith.constant 0 : index
    %c0_0 = arith.constant 0 : index
    %0 = vector.load %arg3[%c0, %c0_0] : memref<512x128xf32, #tpu.memory_space<vmem>>, vector<512x128xf32>
    %c0_1 = arith.constant 0 : index
    %c0_2 = arith.constant 0 : index
    %c0_3 = arith.constant 0 : index
    %1 = vector.load %arg2[%c0_1, %c0_2, %c0_3] : memref<2x16x512xf32, #tpu.memory_space<vmem>>, vector<2x16x512xf32>
    %2 = vector.shape_cast %1 : vector<2x16x512xf32> to vector<32x512xf32>
    %cst = arith.constant dense<0.000000e+00> : vector<32x128xf32>
    %3 = tpu.matmul %2, %0, %cst {dimension_numbers = #tpu.dot_dimension_numbers<[1], [0], [0], [1], [0, 0, 1, 1], [], []>, precision = #tpu.contract_precision<fp32>} : vector<32x512xf32>, vector<512x128xf32>, vector<32x128xf32> -> vector<32x128xf32>
    %4 = vector.extract_strided_slice %3 {offsets = [0, 0], sizes = [16, 128], strides = [1, 1]} : vector<32x128xf32> to vector<16x128xf32>
    %5 = tpu.transpose %4, [1, 0] : vector<16x128xf32> -> vector<128x16xf32>
    %6 = vector.extract_strided_slice %5 {offsets = [0, 0], sizes = [128, 12], strides = [1, 1]} : vector<128x16xf32> to vector<128x12xf32>
    %c0_4 = arith.constant 0 : index
    %c0_5 = arith.constant 0 : index
    %c0_6 = arith.constant 0 : index
    %7 = vector.load %arg4[%c0_4, %c0_5, %c0_6] : memref<2x128x12xf32, #tpu.memory_space<vmem>>, vector<1x128x12xf32>
    %8 = vector.shape_cast %7 : vector<1x128x12xf32> to vector<128x12xf32>
    %9 = vector.shape_cast %6 : vector<128x12xf32> to vector<1x128x12xf32>
    tpu.vector_store %arg4[%c0_4, %c0_5, %c0_6], %9 {strides = array<i32>} : memref<2x128x12xf32, #tpu.memory_space<vmem>>, vector<1x128x12xf32>,
    %10 = vector.extract_strided_slice %3 {offsets = [16, 0], sizes = [16, 128], strides = [1, 1]} : vector<32x128xf32> to vector<16x128xf32>
    %11 = tpu.transpose %10, [1, 0] : vector<16x128xf32> -> vector<128x16xf32>
    %12 = vector.extract_strided_slice %11 {offsets = [0, 0], sizes = [128, 12], strides = [1, 1]} : vector<128x16xf32> to vector<128x12xf32>
    %c1 = arith.constant 1 : index
    %c0_7 = arith.constant 0 : index
    %c0_8 = arith.constant 0 : index
    %13 = vector.load %arg4[%c1, %c0_7, %c0_8] : memref<2x128x12xf32, #tpu.memory_space<vmem>>, vector<1x128x12xf32>
    %14 = vector.shape_cast %13 : vector<1x128x12xf32> to vector<128x12xf32>
    %15 = vector.shape_cast %12 : vector<128x12xf32> to vector<1x128x12xf32>
    tpu.vector_store %arg4[%c1, %c0_7, %c0_8], %15 {strides = array<i32>} : memref<2x128x12xf32, #tpu.memory_space<vmem>>, vector<1x128x12xf32>,
    return
  }
  func.func @transform_0(%arg0: i32, %arg1: i32) -> (i32, i32, i32) {
    %c0_i32 = arith.constant 0 : i32
    %c0_i32_0 = arith.constant 0 : i32
    return %arg0, %c0_i32, %arg1 : i32, i32, i32
  }
  func.func @transform_1(%arg0: i32, %arg1: i32) -> (i32, i32) {
    %c0_i32 = arith.constant 0 : i32
    %c0_i32_0 = arith.constant 0 : i32
    %c0_i32_1 = arith.constant 0 : i32
    return %c0_i32, %c0_i32_0 : i32, i32
  }
  func.func @transform_2(%arg0: i32, %arg1: i32) -> (i32, i32, i32) {
    %c0_i32 = arith.constant 0 : i32
    %c0_i32_0 = arith.constant 0 : i32
    return %arg0, %arg1, %c0_i32 : i32, i32, i32
  }
}

</mosaic_0001>

<llo_original>
// kernel: tpu_custom_call.1
$region0: #{tpu_custom_call.1}
  #allocation0 [shape = 'u32[]', space=smem, size = 0x4, offset = 0x4, fixed_abs, tag = 'smem constant byte address 0x4 - core index']
  #allocation1 [shape = 'u32[144,128]{1,0:T(1,128)}', space=vmem, size = 0x12000, scoped, tag = 'internal scratch']
  #allocation6 [shape = 's32[]', space=sflag, size = 0x4, offset = 0, fixed_abs, tag = 'sflag constant byte address 0x0 - dummy sync flag']
  %s0 = inlined_call_operand.hbm [shape: f32[2,24,512], index: 0, kind: input, shape index: {}]
  %s1 = inlined_call_operand.hbm [shape: f32[512,128], index: 1, kind: input, shape index: {}]
  %s2 = inlined_call_operand.vmem [shape: f32[2,128,12], index: 2, kind: output, shape index: {}]
  %s3 = sld [smem:[#allocation0]]
  $region26: #{tpu_custom_call.1} parent=0
    _
  %s5 = ssub.s32 1, %s3
  %s6 = scalar_select 0, %s5, %s3
  $region1: #{tpu_custom_call.1} parent=0
    #allocation2 [shape = 'u8[65536]{0}', space=vmem, size = 0x10000, scoped, tag = 'input window, operand 0, single buffered']
    #allocation3 [shape = 's32[1]{0}', space=sflag, size = 0x4, scoped, tag = 'scoped memory for tpu_custom_call.1']
    #allocation4 [shape = 'u8[262144]{0}', space=vmem, size = 0x40000, scoped, tag = 'input window, operand 1, single buffered']
    #allocation5 [shape = 's32[1]{0}', space=sflag, size = 0x4, scoped, tag = 'scoped memory for tpu_custom_call.1']
    %7 = vsyncpa [#allocation3], 0
    %8 = vsyncpa [#allocation5], 0
    // Predicated region
    $region2: #{tpu_custom_call.1} parent=1 // pred_check
      _
    $region3: #{tpu_custom_call.1} parent=1 // pred_check_branch
      %10 = sbr.rel (0) target = $region5
    $region4: #{tpu_custom_call.1} parent=1 // pred_region
      #allocation7 [shape = 'u32[6]{0}', space=smem, size = 0x18, scoped, tag = 'DMA stride descriptor']
      %s12 = ssub.s32 2048, 2048
      %13 = vsyncadd [#allocation3], %s12
      %s15 = sshll.u32 1, 14
      %s16 = sxor.u32 4294967295, %s15
      %s18 = sld [smem:[#allocation0]]
      %s19 = sadd.s32 2, %s18
      %s21 = sshll.u32 7, 26
      %s22 = sxor.u32 4294967295, %s21
      %s23 = sand.u32 0, %s22
      %s24 = sshll.u32 %s19, 26
      %s25 = sor.u32 %s23, %s24
      %s26 = sshll.u32 [#allocation2], 4
      %s27 = int_to_ptr.vmem [resolvable:$true] %s26
      %33 = sst [smem:[#allocation7]] 1536
      %s34 = scalar_lea.smem [#allocation7], 1
      %35 = sst [smem:[%s34]] 1024
      %s36 = scalar_lea.smem [#allocation7], 2
      %37 = sst [smem:[%s36]] 2
      %s38 = scalar_lea.smem [#allocation7], 3
      %39 = sst [smem:[%s38]] 512
      %s40 = scalar_lea.smem [#allocation7], 4
      %41 = sst [smem:[%s40]] 512
      %s42 = scalar_lea.smem [#allocation7], 5
      %43 = sst [smem:[%s42]] 32
      %45 = dma.general %s0, 2048, %s27, [#allocation3], 131072, [#allocation7], %s25, 0
    $region5: #{tpu_custom_call.1} parent=1 // pred_fallthru
      _
    // Predicated region
    $region6: #{tpu_custom_call.1} parent=1 // pred_check
      _
    $region7: #{tpu_custom_call.1} parent=1 // pred_check_branch
      %47 = sbr.rel (0) target = $region9
    $region8: #{tpu_custom_call.1} parent=1 // pred_region
      %s49 = ssub.s32 8192, 8192
      %50 = vsyncadd [#allocation5], %s49
      %s51 = sshll.u32 [#allocation4], 4
      %s52 = int_to_ptr.vmem [resolvable:$true] %s51
      %57 = dma.hbm_to_vmem [thread:$0]  %s1, 8192, %s52, [#allocation5], 128, 128, 8
    $region9: #{tpu_custom_call.1} parent=1 // pred_fallthru
      _
    // Predicated region
    $region10: #{tpu_custom_call.1} parent=1 // pred_check
      _
    $region11: #{tpu_custom_call.1} parent=1 // pred_check_branch
      %59 = sbr.rel (0) target = $region13
    $region12: #{tpu_custom_call.1} parent=1 // pred_region
      %60 = dma.done [#allocation3], 2048
    $region13: #{tpu_custom_call.1} parent=1 // pred_fallthru
      _
    // Predicated region
    $region14: #{tpu_custom_call.1} parent=1 // pred_check
      _
    $region15: #{tpu_custom_call.1} parent=1 // pred_check_branch
      %62 = sbr.rel (0) target = $region17
    $region16: #{tpu_custom_call.1} parent=1 // pred_region
      %63 = dma.done [#allocation5], 8192
    $region17: #{tpu_custom_call.1} parent=1 // pred_fallthru
      _
    %v64 = vld [vmem:[#allocation4] sm:$0xff]
    %v65 = vld [vmem:[#allocation4 + $0x8] sm:$0xff]
    %v66 = vld [vmem:[#allocation4 + $0x10] sm:$0xff]
    %v67 = vld [vmem:[#allocation4 + $0x18] sm:$0xff]
    %v68 = vld [vmem:[#allocation4 + $0x20] sm:$0xff]
    %v69 = vld [vmem:[#allocation4 + $0x28] sm:$0xff]
    %v70 = vld [vmem:[#allocation4 + $0x30] sm:$0xff]
    %v71 = vld [vmem:[#allocation4 + $0x38] sm:$0xff]
    %v72 = vld [vmem:[#allocation4 + $0x40] sm:$0xff]
    %v73 = vld [vmem:[#allocation4 + $0x48] sm:$0xff]
    %v74 = vld [vmem:[#allocation4 + $0x50] sm:$0xff]
    %v75 = vld [vmem:[#allocation4 + $0x58] sm:$0xff]
    %v76 = vld [vmem:[#allocation4 + $0x60] sm:$0xff]
    %v77 = vld [vmem:[#allocation4 + $0x68] sm:$0xff]
    %v78 = vld [vmem:[#allocation4 + $0x70] sm:$0xff]
    %v79 = vld [vmem:[#allocation4 + $0x78] sm:$0xff]
    %v80 = vld [vmem:[#allocation4 + $0x80] sm:$0xff]
    %v81 = vld [vmem:[#allocation4 + $0x88] sm:$0xff]
    %v82 = vld [vmem:[#allocation4 + $0x90] sm:$0xff]
    %v83 = vld [vmem:[#allocation4 + $0x98] sm:$0xff]
    %v84 = vld [vmem:[#allocation4 + $0xa0] sm:$0xff]
    %v85 = vld [vmem:[#allocation4 + $0xa8] sm:$0xff]
    %v86 = vld [vmem:[#allocation4 + $0xb0] sm:$0xff]
    %v87 = vld [vmem:[#allocation4 + $0xb8] sm:$0xff]
    %v88 = vld [vmem:[#allocation4 + $0xc0] sm:$0xff]
    %v89 = vld [vmem:[#allocation4 + $0xc8] sm:$0xff]
    %v90 = vld [vmem:[#allocation4 + $0xd0] sm:$0xff]
    %v91 = vld [vmem:[#allocation4 + $0xd8] sm:$0xff]
    %v92 = vld [vmem:[#allocation4 + $0xe0] sm:$0xff]
    %v93 = vld [vmem:[#allocation4 + $0xe8] sm:$0xff]
    %v94 = vld [vmem:[#allocation4 + $0xf0] sm:$0xff]
    %v95 = vld [vmem:[#allocation4 + $0xf8] sm:$0xff]
    %v96 = vld [vmem:[#allocation4 + $0x100] sm:$0xff]
    %v97 = vld [vmem:[#allocation4 + $0x108] sm:$0xff]
    %v98 = vld [vmem:[#allocation4 + $0x110] sm:$0xff]
    %v99 = vld [vmem:[#allocation4 + $0x118] sm:$0xff]
    %v100 = vld [vmem:[#allocation4 + $0x120] sm:$0xff]
    %v101 = vld [vmem:[#allocation4 + $0x128] sm:$0xff]
    %v102 = vld [vmem:[#allocation4 + $0x130] sm:$0xff]
    %v103 = vld [vmem:[#allocation4 + $0x138] sm:$0xff]
    %v104 = vld [vmem:[#allocation4 + $0x140] sm:$0xff]
    %v105 = vld [vmem:[#allocation4 + $0x148] sm:$0xff]
    %v106 = vld [vmem:[#allocation4 + $0x150] sm:$0xff]
    %v107 = vld [vmem:[#allocation4 + $0x158] sm:$0xff]
    %v108 = vld [vmem:[#allocation4 + $0x160] sm:$0xff]
    %v109 = vld [vmem:[#allocation4 + $0x168] sm:$0xff]
    %v110 = vld [vmem:[#allocation4 + $0x170] sm:$0xff]
    %v111 = vld [vmem:[#allocation4 + $0x178] sm:$0xff]
    %v112 = vld [vmem:[#allocation4 + $0x180] sm:$0xff]
    %v113 = vld [vmem:[#allocation4 + $0x188] sm:$0xff]
    %v114 = vld [vmem:[#allocation4 + $0x190] sm:$0xff]
    %v115 = vld [vmem:[#allocation4 + $0x198] sm:$0xff]
    %v116 = vld [vmem:[#allocation4 + $0x1a0] sm:$0xff]
    %v117 = vld [vmem:[#allocation4 + $0x1a8] sm:$0xff]
    %v118 = vld [vmem:[#allocation4 + $0x1b0] sm:$0xff]
    %v119 = vld [vmem:[#allocation4 + $0x1b8] sm:$0xff]
    %v120 = vld [vmem:[#allocation4 + $0x1c0] sm:$0xff]
    %v121 = vld [vmem:[#allocation4 + $0x1c8] sm:$0xff]
    %v122 = vld [vmem:[#allocation4 + $0x1d0] sm:$0xff]
    %v123 = vld [vmem:[#allocation4 + $0x1d8] sm:$0xff]
    %v124 = vld [vmem:[#allocation4 + $0x1e0] sm:$0xff]
    %v125 = vld [vmem:[#allocation4 + $0x1e8] sm:$0xff]
    %v126 = vld [vmem:[#allocation4 + $0x1f0] sm:$0xff]
    %v127 = vld [vmem:[#allocation4 + $0x1f8] sm:$0xff]
    %v128 = vld [vmem:[#allocation2] sm:$0xff]
    %v129 = vld [vmem:[#allocation2 + $0x8] sm:$0xff]
    %v130 = vld [vmem:[#allocation2 + $0x10] sm:$0xff]
    %v131 = vld [vmem:[#allocation2 + $0x18] sm:$0xff]
    %v132 = vld [vmem:[#allocation2 + $0x20] sm:$0xff]
    %v133 = vld [vmem:[#allocation2 + $0x28] sm:$0xff]
    %v134 = vld [vmem:[#allocation2 + $0x30] sm:$0xff]
    %v135 = vld [vmem:[#allocation2 + $0x38] sm:$0xff]
    %v136 = vld [vmem:[#allocation2 + $0x40] sm:$0xff]
    %v137 = vld [vmem:[#allocation2 + $0x48] sm:$0xff]
    %v138 = vld [vmem:[#allocation2 + $0x50] sm:$0xff]
    %v139 = vld [vmem:[#allocation2 + $0x58] sm:$0xff]
    %v140 = vld [vmem:[#allocation2 + $0x60] sm:$0xff]
    %v141 = vld [vmem:[#allocation2 + $0x68] sm:$0xff]
    %v142 = vld [vmem:[#allocation2 + $0x70] sm:$0xff]
    %v143 = vld [vmem:[#allocation2 + $0x78] sm:$0xff]
    %144 = vmatprep.subr.mxu0 0.0
    %v145 = vand.u32 %v79, 4294901760
    %146 = vmatpush1.msra.mxu0 %v145
    %147 = vmatprep.subr.mxu0 0.0
    %v148 = vand.u32 %v78, 4294901760
    %149 = vmatpush1.msra.mxu0 %v148
    %150 = vmatprep.subr.mxu0 0.0
    %v151 = vand.u32 %v77, 4294901760
    %152 = vmatpush1.msra.mxu0 %v151
    %153 = vmatprep.subr.mxu0 0.0
    %v154 = vand.u32 %v76, 4294901760
    %155 = vmatpush1.msra.mxu0 %v154
    %156 = vmatprep.subr.mxu0 0.0
    %v157 = vand.u32 %v75, 4294901760
    %158 = vmatpush1.msra.mxu0 %v157
    %159 = vmatprep.subr.mxu0 0.0
    %v160 = vand.u32 %v74, 4294901760
    %161 = vmatpush1.msra.mxu0 %v160
    %162 = vmatprep.subr.mxu0 0.0
    %v163 = vand.u32 %v73, 4294901760
    %164 = vmatpush1.msra.mxu0 %v163
    %165 = vmatprep.subr.mxu0 0.0
    %v166 = vand.u32 %v72, 4294901760
    %167 = vmatpush1.msra.mxu0 %v166
    %168 = vmatprep.subr.mxu0 0.0
    %v169 = vand.u32 %v71, 4294901760
    %170 = vmatpush1.msra.mxu0 %v169
    %171 = vmatprep.subr.mxu0 0.0
    %v172 = vand.u32 %v70, 4294901760
    %173 = vmatpush1.msra.mxu0 %v172
    %174 = vmatprep.subr.mxu0 0.0
    %v175 = vand.u32 %v69, 4294901760
    %176 = vmatpush1.msra.mxu0 %v175
    %177 = vmatprep.subr.mxu0 0.0
    %v178 = vand.u32 %v68, 4294901760
    %179 = vmatpush1.msra.mxu0 %v178
    %180 = vmatprep.subr.mxu0 0.0
    %v181 = vand.u32 %v67, 4294901760
    %182 = vmatpush1.msra.mxu0 %v181
    %183 = vmatprep.subr.mxu0 0.0
    %v184 = vand.u32 %v66, 4294901760
    %185 = vmatpush1.msra.mxu0 %v184
    %186 = vmatprep.subr.mxu0 0.0
    %v187 = vand.u32 %v65, 4294901760
    %188 = vmatpush1.msra.mxu0 %v187
    %189 = vmatprep.subr.mxu0 0.0
    %v190 = vand.u32 %v64, 4294901760
    %191 = vmatpush1.msra.mxu0 %v190
    %192 = vmatprep.subr.mxu0 0.0
    %v193 = vand.u32 %v95, 4294901760
    %194 = vmatpush2.msra.mxu0 %v193
    %195 = vmatprep.subr.mxu0 0.0
    %v196 = vand.u32 %v94, 4294901760
    %197 = vmatpush2.msra.mxu0 %v196
    %198 = vmatprep.subr.mxu0 0.0
    %v199 = vand.u32 %v93, 4294901760
    %200 = vmatpush2.msra.mxu0 %v199
    %201 = vmatprep.subr.mxu0 0.0
    %v202 = vand.u32 %v92, 4294901760
    %203 = vmatpush2.msra.mxu0 %v202
    %204 = vmatprep.subr.mxu0 0.0
    %v205 = vand.u32 %v91, 4294901760
    %206 = vmatpush2.msra.mxu0 %v205
    %207 = vmatprep.subr.mxu0 0.0
    %v208 = vand.u32 %v90, 4294901760
    %209 = vmatpush2.msra.mxu0 %v208
    %210 = vmatprep.subr.mxu0 0.0
    %v211 = vand.u32 %v89, 4294901760
    %212 = vmatpush2.msra.mxu0 %v211
    %213 = vmatprep.subr.mxu0 0.0
    %v214 = vand.u32 %v88, 4294901760
    %215 = vmatpush2.msra.mxu0 %v214
    %216 = vmatprep.subr.mxu0 0.0
    %v217 = vand.u32 %v87, 4294901760
    %218 = vmatpush2.msra.mxu0 %v217
    %219 = vmatprep.subr.mxu0 0.0
    %v220 = vand.u32 %v86, 4294901760
    %221 = vmatpush2.msra.mxu0 %v220
    %222 = vmatprep.subr.mxu0 0.0
    %v223 = vand.u32 %v85, 4294901760
    %224 = vmatpush2.msra.mxu0 %v223
    %225 = vmatprep.subr.mxu0 0.0
    %v226 = vand.u32 %v84, 4294901760
    %227 = vmatpush2.msra.mxu0 %v226
    %228 = vmatprep.subr.mxu0 0.0
    %v229 = vand.u32 %v83, 4294901760
    %230 = vmatpush2.msra.mxu0 %v229
    %231 = vmatprep.subr.mxu0 0.0
    %v232 = vand.u32 %v82, 4294901760
    %233 = vmatpush2.msra.mxu0 %v232
    %234 = vmatprep.subr.mxu0 0.0
    %v235 = vand.u32 %v81, 4294901760
    %236 = vmatpush2.msra.mxu0 %v235
    %237 = vmatprep.subr.mxu0 0.0
    %v238 = vand.u32 %v80, 4294901760
    %239 = vmatpush2.msra.mxu0 %v238
    %v240 = vand.u32 %v129, 4294901760
    %v241 = vsub.f32 %v129, %v240
    %v242 = vand.u32 %v241, 4294901760
    %v243 = vsub.f32 %v241, %v242
    %v244 = vand.u32 %v243, 4294901760
    %245 = vmatprep.mubr.f32.mxu0 %v244
    %v246 = vand.u32 %v128, 4294901760
    %v247 = vsub.f32 %v128, %v246
    %v248 = vand.u32 %v247, 4294901760
    %v249 = vsub.f32 %v247, %v248
    %v250 = vand.u32 %v249, 4294901760
    %251 = vmatmul.mubr.f32.gmra.mxu0 %v250
    %v252 = vpop.f32.mrf.mxu0
    %v253 = vadd.f32 0.0, %v252
    %v254 = vpop.f32.mrf.mxu0
    %v255 = vand.u32 %v133, 4294901760
    %v256 = vsub.f32 %v133, %v255
    %v257 = vand.u32 %v256, 4294901760
    %v258 = vsub.f32 %v256, %v257
    %v259 = vand.u32 %v258, 4294901760
    %260 = vmatprep.mubr.f32.mxu0 %v259
    %v261 = vand.u32 %v132, 4294901760
    %v262 = vsub.f32 %v132, %v261
    %v263 = vand.u32 %v262, 4294901760
    %v264 = vsub.f32 %v262, %v263
    %v265 = vand.u32 %v264, 4294901760
    %266 = vmatmul.mubr.f32.gmra.mxu0 %v265
    %v267 = vpop.f32.mrf.mxu0
    %v268 = vadd.f32 0.0, %v267
    %v269 = vpop.f32.mrf.mxu0
    %v270 = vand.u32 %v137, 4294901760
    %v271 = vsub.f32 %v137, %v270
    %v272 = vand.u32 %v271, 4294901760
    %v273 = vsub.f32 %v271, %v272
    %v274 = vand.u32 %v273, 4294901760
    %275 = vmatprep.mubr.f32.mxu0 %v274
    %v276 = vand.u32 %v136, 4294901760
    %v277 = vsub.f32 %v136, %v276
    %v278 = vand.u32 %v277, 4294901760
    %v279 = vsub.f32 %v277, %v278
    %v280 = vand.u32 %v279, 4294901760
    %281 = vmatmul.mubr.f32.gmra.mxu0 %v280
    %v282 = vpop.f32.mrf.mxu0
    %v283 = vadd.f32 0.0, %v282
    %v284 = vpop.f32.mrf.mxu0
    %v285 = vand.u32 %v141, 4294901760
    %v286 = vsub.f32 %v141, %v285
    %v287 = vand.u32 %v286, 4294901760
    %v288 = vsub.f32 %v286, %v287
    %v289 = vand.u32 %v288, 4294901760
    %290 = vmatprep.mubr.f32.mxu0 %v289
    %v291 = vand.u32 %v140, 4294901760
    %v292 = vsub.f32 %v140, %v291
    %v293 = vand.u32 %v292, 4294901760
    %v294 = vsub.f32 %v292, %v293
    %v295 = vand.u32 %v294, 4294901760
    %296 = vmatmul.mubr.f32.gmra.mxu0 %v295
    %v297 = vpop.f32.mrf.mxu0
    %v298 = vadd.f32 0.0, %v297
    %v299 = vpop.f32.mrf.mxu0
    %300 = vdwg.mxu0
    %301 = vmatprep.subr.mxu0 0.0
    %v302 = vand.u32 %v79, 4294901760
    %v303 = vsub.f32 %v79, %v302
    %v304 = vand.u32 %v303, 4294901760
    %v305 = vsub.f32 %v303, %v304
    %v306 = vand.u32 %v305, 4294901760
    %307 = vmatpush1.msra.mxu0 %v306
    %308 = vmatprep.subr.mxu0 0.0
    %v309 = vand.u32 %v78, 4294901760
    %v310 = vsub.f32 %v78, %v309
    %v311 = vand.u32 %v310, 4294901760
    %v312 = vsub.f32 %v310, %v311
    %v313 = vand.u32 %v312, 4294901760
    %314 = vmatpush1.msra.mxu0 %v313
    %315 = vmatprep.subr.mxu0 0.0
    %v316 = vand.u32 %v77, 4294901760
    %v317 = vsub.f32 %v77, %v316
    %v318 = vand.u32 %v317, 4294901760
    %v319 = vsub.f32 %v317, %v318
    %v320 = vand.u32 %v319, 4294901760
    %321 = vmatpush1.msra.mxu0 %v320
    %322 = vmatprep.subr.mxu0 0.0
    %v323 = vand.u32 %v76, 4294901760
    %v324 = vsub.f32 %v76, %v323
    %v325 = vand.u32 %v324, 4294901760
    %v326 = vsub.f32 %v324, %v325
    %v327 = vand.u32 %v326, 4294901760
    %328 = vmatpush1.msra.mxu0 %v327
    %329 = vmatprep.subr.mxu0 0.0
    %v330 = vand.u32 %v75, 4294901760
    %v331 = vsub.f32 %v75, %v330
    %v332 = vand.u32 %v331, 4294901760
    %v333 = vsub.f32 %v331, %v332
    %v334 = vand.u32 %v333, 4294901760
    %335 = vmatpush1.msra.mxu0 %v334
    %336 = vmatprep.subr.mxu0 0.0
    %v337 = vand.u32 %v74, 4294901760
    %v338 = vsub.f32 %v74, %v337
    %v339 = vand.u32 %v338, 4294901760
    %v340 = vsub.f32 %v338, %v339
    %v341 = vand.u32 %v340, 4294901760
    %342 = vmatpush1.msra.mxu0 %v341
    %343 = vmatprep.subr.mxu0 0.0
    %v344 = vand.u32 %v73, 4294901760
    %v345 = vsub.f32 %v73, %v344
    %v346 = vand.u32 %v345, 4294901760
    %v347 = vsub.f32 %v345, %v346
    %v348 = vand.u32 %v347, 4294901760
    %349 = vmatpush1.msra.mxu0 %v348
    %350 = vmatprep.subr.mxu0 0.0
    %v351 = vand.u32 %v72, 4294901760
    %v352 = vsub.f32 %v72, %v351
    %v353 = vand.u32 %v352, 4294901760
    %v354 = vsub.f32 %v352, %v353
    %v355 = vand.u32 %v354, 4294901760
    %356 = vmatpush1.msra.mxu0 %v355
    %357 = vmatprep.subr.mxu0 0.0
    %v358 = vand.u32 %v71, 4294901760
    %v359 = vsub.f32 %v71, %v358
    %v360 = vand.u32 %v359, 4294901760
    %v361 = vsub.f32 %v359, %v360
    %v362 = vand.u32 %v361, 4294901760
    %363 = vmatpush1.msra.mxu0 %v362
    %364 = vmatprep.subr.mxu0 0.0
    %v365 = vand.u32 %v70, 4294901760
    %v366 = vsub.f32 %v70, %v365
    %v367 = vand.u32 %v366, 4294901760
    %v368 = vsub.f32 %v366, %v367
    %v369 = vand.u32 %v368, 4294901760
    %370 = vmatpush1.msra.mxu0 %v369
    %371 = vmatprep.subr.mxu0 0.0
    %v372 = vand.u32 %v69, 4294901760
    %v373 = vsub.f32 %v69, %v372
    %v374 = vand.u32 %v373, 4294901760
    %v375 = vsub.f32 %v373, %v374
    %v376 = vand.u32 %v375, 4294901760
    %377 = vmatpush1.msra.mxu0 %v376
    %378 = vmatprep.subr.mxu0 0.0
    %v379 = vand.u32 %v68, 4294901760
    %v380 = vsub.f32 %v68, %v379
    %v381 = vand.u32 %v380, 4294901760
    %v382 = vsub.f32 %v380, %v381
    %v383 = vand.u32 %v382, 4294901760
    %384 = vmatpush1.msra.mxu0 %v383
    %385 = vmatprep.subr.mxu0 0.0
    %v386 = vand.u32 %v67, 4294901760
    %v387 = vsub.f32 %v67, %v386
    %v388 = vand.u32 %v387, 4294901760
    %v389 = vsub.f32 %v387, %v388
    %v390 = vand.u32 %v389, 4294901760
    %391 = vmatpush1.msra.mxu0 %v390
    %392 = vmatprep.subr.mxu0 0.0
    %v393 = vand.u32 %v66, 4294901760
    %v394 = vsub.f32 %v66, %v393
    %v395 = vand.u32 %v394, 4294901760
    %v396 = vsub.f32 %v394, %v395
    %v397 = vand.u32 %v396, 4294901760
    %398 = vmatpush1.msra.mxu0 %v397
    %399 = vmatprep.subr.mxu0 0.0
    %v400 = vand.u32 %v65, 4294901760
    %v401 = vsub.f32 %v65, %v400
    %v402 = vand.u32 %v401, 4294901760
    %v403 = vsub.f32 %v401, %v402
    %v404 = vand.u32 %v403, 4294901760
    %405 = vmatpush1.msra.mxu0 %v404
    %406 = vmatprep.subr.mxu0 0.0
    %v407 = vand.u32 %v64, 4294901760
    %v408 = vsub.f32 %v64, %v407
    %v409 = vand.u32 %v408, 4294901760
    %v410 = vsub.f32 %v408, %v409
    %v411 = vand.u32 %v410, 4294901760
    %412 = vmatpush1.msra.mxu0 %v411
    %413 = vmatprep.subr.mxu0 0.0
    %v414 = vand.u32 %v95, 4294901760
    %v415 = vsub.f32 %v95, %v414
    %v416 = vand.u32 %v415, 4294901760
    %v417 = vsub.f32 %v415, %v416
    %v418 = vand.u32 %v417, 4294901760
    %419 = vmatpush2.msra.mxu0 %v418
    %420 = vmatprep.subr.mxu0 0.0
    %v421 = vand.u32 %v94, 4294901760
    %v422 = vsub.f32 %v94, %v421
    %v423 = vand.u32 %v422, 4294901760
    %v424 = vsub.f32 %v422, %v423
    %v425 = vand.u32 %v424, 4294901760
    %426 = vmatpush2.msra.mxu0 %v425
    %427 = vmatprep.subr.mxu0 0.0
    %v428 = vand.u32 %v93, 4294901760
    %v429 = vsub.f32 %v93, %v428
    %v430 = vand.u32 %v429, 4294901760
    %v431 = vsub.f32 %v429, %v430
    %v432 = vand.u32 %v431, 4294901760
    %433 = vmatpush2.msra.mxu0 %v432
    %434 = vmatprep.subr.mxu0 0.0
    %v435 = vand.u32 %v92, 4294901760
    %v436 = vsub.f32 %v92, %v435
    %v437 = vand.u32 %v436, 4294901760
    %v438 = vsub.f32 %v436, %v437
    %v439 = vand.u32 %v438, 4294901760
    %440 = vmatpush2.msra.mxu0 %v439
    %441 = vmatprep.subr.mxu0 0.0
    %v442 = vand.u32 %v91, 4294901760
    %v443 = vsub.f32 %v91, %v442
    %v444 = vand.u32 %v443, 4294901760
    %v445 = vsub.f32 %v443, %v444
    %v446 = vand.u32 %v445, 4294901760
    %447 = vmatpush2.msra.mxu0 %v446
    %448 = vmatprep.subr.mxu0 0.0
    %v449 = vand.u32 %v90, 4294901760
    %v450 = vsub.f32 %v90, %v449
    %v451 = vand.u32 %v450, 4294901760
    %v452 = vsub.f32 %v450, %v451
    %v453 = vand.u32 %v452, 4294901760
    %454 = vmatpush2.msra.mxu0 %v453
    %455 = vmatprep.subr.mxu0 0.0
    %v456 = vand.u32 %v89, 4294901760
    %v457 = vsub.f32 %v89, %v456
    %v458 = vand.u32 %v457, 4294901760
    %v459 = vsub.f32 %v457, %v458
    %v460 = vand.u32 %v459, 4294901760
    %461 = vmatpush2.msra.mxu0 %v460
    %462 = vmatprep.subr.mxu0 0.0
    %v463 = vand.u32 %v88, 4294901760
    %v464 = vsub.f32 %v88, %v463
    %v465 = vand.u32 %v464, 4294901760
    %v466 = vsub.f32 %v464, %v465
    %v467 = vand.u32 %v466, 4294901760
    %468 = vmatpush2.msra.mxu0 %v467
    %469 = vmatprep.subr.mxu0 0.0
    %v470 = vand.u32 %v87, 4294901760
    %v471 = vsub.f32 %v87, %v470
    %v472 = vand.u32 %v471, 4294901760
    %v473 = vsub.f32 %v471, %v472
    %v474 = vand.u32 %v473, 4294901760
    %475 = vmatpush2.msra.mxu0 %v474
    %476 = vmatprep.subr.mxu0 0.0
    %v477 = vand.u32 %v86, 4294901760
    %v478 = vsub.f32 %v86, %v477
    %v479 = vand.u32 %v478, 4294901760
    %v480 = vsub.f32 %v478, %v479
    %v481 = vand.u32 %v480, 4294901760
    %482 = vmatpush2.msra.mxu0 %v481
    %483 = vmatprep.subr.mxu0 0.0
    %v484 = vand.u32 %v85, 4294901760
    %v485 = vsub.f32 %v85, %v484
    %v486 = vand.u32 %v485, 4294901760
    %v487 = vsub.f32 %v485, %v486
    %v488 = vand.u32 %v487, 4294901760
    %489 = vmatpush2.msra.mxu0 %v488
    %490 = vmatprep.subr.mxu0 0.0
    %v491 = vand.u32 %v84, 4294901760
    %v492 = vsub.f32 %v84, %v491
    %v493 = vand.u32 %v492, 4294901760
    %v494 = vsub.f32 %v492, %v493
    %v495 = vand.u32 %v494, 4294901760
    %496 = vmatpush2.msra.mxu0 %v495
    %497 = vmatprep.subr.mxu0 0.0
    %v498 = vand.u32 %v83, 4294901760
    %v499 = vsub.f32 %v83, %v498
    %v500 = vand.u32 %v499, 4294901760
    %v501 = vsub.f32 %v499, %v500
    %v502 = vand.u32 %v501, 4294901760
    %503 = vmatpush2.msra.mxu0 %v502
    %504 = vmatprep.subr.mxu0 0.0
    %v505 = vand.u32 %v82, 4294901760
    %v506 = vsub.f32 %v82, %v505
    %v507 = vand.u32 %v506, 4294901760
    %v508 = vsub.f32 %v506, %v507
    %v509 = vand.u32 %v508, 4294901760
    %510 = vmatpush2.msra.mxu0 %v509
    %511 = vmatprep.subr.mxu0 0.0
    %v512 = vand.u32 %v81, 4294901760
    %v513 = vsub.f32 %v81, %v512
    %v514 = vand.u32 %v513, 4294901760
    %v515 = vsub.f32 %v513, %v514
    %v516 = vand.u32 %v515, 4294901760
    %517 = vmatpush2.msra.mxu0 %v516
    %518 = vmatprep.subr.mxu0 0.0
    %v519 = vand.u32 %v80, 4294901760
    %v520 = vsub.f32 %v80, %v519
    %v521 = vand.u32 %v520, 4294901760
    %v522 = vsub.f32 %v520, %v521
    %v523 = vand.u32 %v522, 4294901760
    %524 = vmatpush2.msra.mxu0 %v523
    %v525 = vand.u32 %v129, 4294901760
    %526 = vmatprep.mubr.f32.mxu0 %v525
    %v527 = vand.u32 %v128, 4294901760
    %528 = vmatmul.mubr.f32.gmra.mxu0 %v527
    %v529 = vpop.f32.mrf.mxu0
    %v530 = vadd.f32 %v253, %v529
    %v531 = vpop.f32.mrf.mxu0
    %v532 = vand.u32 %v133, 4294901760
    %533 = vmatprep.mubr.f32.mxu0 %v532
    %v534 = vand.u32 %v132, 4294901760
    %535 = vmatmul.mubr.f32.gmra.mxu0 %v534
    %v536 = vpop.f32.mrf.mxu0
    %v537 = vadd.f32 %v268, %v536
    %v538 = vpop.f32.mrf.mxu0
    %v539 = vand.u32 %v137, 4294901760
    %540 = vmatprep.mubr.f32.mxu0 %v539
    %v541 = vand.u32 %v136, 4294901760
    %542 = vmatmul.mubr.f32.gmra.mxu0 %v541
    %v543 = vpop.f32.mrf.mxu0
    %v544 = vadd.f32 %v283, %v543
    %v545 = vpop.f32.mrf.mxu0
    %v546 = vand.u32 %v141, 4294901760
    %547 = vmatprep.mubr.f32.mxu0 %v546
    %v548 = vand.u32 %v140, 4294901760
    %549 = vmatmul.mubr.f32.gmra.mxu0 %v548
    %v550 = vpop.f32.mrf.mxu0
    %v551 = vadd.f32 %v298, %v550
    %v552 = vpop.f32.mrf.mxu0
    %553 = vdwg.mxu0
    %554 = vmatprep.subr.mxu0 0.0
    %v555 = vand.u32 %v79, 4294901760
    %v556 = vsub.f32 %v79, %v555
    %557 = vmatpush1.msra.mxu0 %v556
    %558 = vmatprep.subr.mxu0 0.0
    %v559 = vand.u32 %v78, 4294901760
    %v560 = vsub.f32 %v78, %v559
    %561 = vmatpush1.msra.mxu0 %v560
    %562 = vmatprep.subr.mxu0 0.0
    %v563 = vand.u32 %v77, 4294901760
    %v564 = vsub.f32 %v77, %v563
    %565 = vmatpush1.msra.mxu0 %v564
    %566 = vmatprep.subr.mxu0 0.0
    %v567 = vand.u32 %v76, 4294901760
    %v568 = vsub.f32 %v76, %v567
    %569 = vmatpush1.msra.mxu0 %v568
    %570 = vmatprep.subr.mxu0 0.0
    %v571 = vand.u32 %v75, 4294901760
    %v572 = vsub.f32 %v75, %v571
    %573 = vmatpush1.msra.mxu0 %v572
    %574 = vmatprep.subr.mxu0 0.0
    %v575 = vand.u32 %v74, 4294901760
    %v576 = vsub.f32 %v74, %v575
    %577 = vmatpush1.msra.mxu0 %v576
    %578 = vmatprep.subr.mxu0 0.0
    %v579 = vand.u32 %v73, 4294901760
    %v580 = vsub.f32 %v73, %v579
    %581 = vmatpush1.msra.mxu0 %v580
    %582 = vmatprep.subr.mxu0 0.0
    %v583 = vand.u32 %v72, 4294901760
    %v584 = vsub.f32 %v72, %v583
    %585 = vmatpush1.msra.mxu0 %v584
    %586 = vmatprep.subr.mxu0 0.0
    %v587 = vand.u32 %v71, 4294901760
    %v588 = vsub.f32 %v71, %v587
    %589 = vmatpush1.msra.mxu0 %v588
    %590 = vmatprep.subr.mxu0 0.0
    %v591 = vand.u32 %v70, 4294901760
    %v592 = vsub.f32 %v70, %v591
    %593 = vmatpush1.msra.mxu0 %v592
    %594 = vmatprep.subr.mxu0 0.0
    %v595 = vand.u32 %v69, 4294901760
    %v596 = vsub.f32 %v69, %v595
    %597 = vmatpush1.msra.mxu0 %v596
    %598 = vmatprep.subr.mxu0 0.0
    %v599 = vand.u32 %v68, 4294901760
    %v600 = vsub.f32 %v68, %v599
    %601 = vmatpush1.msra.mxu0 %v600
    %602 = vmatprep.subr.mxu0 0.0
    %v603 = vand.u32 %v67, 4294901760
    %v604 = vsub.f32 %v67, %v603
    %605 = vmatpush1.msra.mxu0 %v604
    %606 = vmatprep.subr.mxu0 0.0
    %v607 = vand.u32 %v66, 4294901760
    %v608 = vsub.f32 %v66, %v607
    %609 = vmatpush1.msra.mxu0 %v608
    %610 = vmatprep.subr.mxu0 0.0
    %v611 = vand.u32 %v65, 4294901760
    %v612 = vsub.f32 %v65, %v611
    %613 = vmatpush1.msra.mxu0 %v612
    %614 = vmatprep.subr.mxu0 0.0
    %v615 = vand.u32 %v64, 4294901760
    %v616 = vsub.f32 %v64, %v615
    %617 = vmatpush1.msra.mxu0 %v616
    %618 = vmatprep.subr.mxu0 0.0
    %v619 = vand.u32 %v95, 4294901760
    %v620 = vsub.f32 %v95, %v619
    %621 = vmatpush2.msra.mxu0 %v620
    %622 = vmatprep.subr.mxu0 0.0
    %v623 = vand.u32 %v94, 4294901760
    %v624 = vsub.f32 %v94, %v623
    %625 = vmatpush2.msra.mxu0 %v624
    %626 = vmatprep.subr.mxu0 0.0
    %v627 = vand.u32 %v93, 4294901760
    %v628 = vsub.f32 %v93, %v627
    %629 = vmatpush2.msra.mxu0 %v628
    %630 = vmatprep.subr.mxu0 0.0
    %v631 = vand.u32 %v92, 4294901760
    %v632 = vsub.f32 %v92, %v631
    %633 = vmatpush2.msra.mxu0 %v632
    %634 = vmatprep.subr.mxu0 0.0
    %v635 = vand.u32 %v91, 4294901760
    %v636 = vsub.f32 %v91, %v635
    %637 = vmatpush2.msra.mxu0 %v636
    %638 = vmatprep.subr.mxu0 0.0
    %v639 = vand.u32 %v90, 4294901760
    %v640 = vsub.f32 %v90, %v639
    %641 = vmatpush2.msra.mxu0 %v640
    %642 = vmatprep.subr.mxu0 0.0
    %v643 = vand.u32 %v89, 4294901760
    %v644 = vsub.f32 %v89, %v643
    %645 = vmatpush2.msra.mxu0 %v644
    %646 = vmatprep.subr.mxu0 0.0
    %v647 = vand.u32 %v88, 4294901760
    %v648 = vsub.f32 %v88, %v647
    %649 = vmatpush2.msra.mxu0 %v648
    %650 = vmatprep.subr.mxu0 0.0
    %v651 = vand.u32 %v87, 4294901760
    %v652 = vsub.f32 %v87, %v651
    %653 = vmatpush2.msra.mxu0 %v652
    %654 = vmatprep.subr.mxu0 0.0
    %v655 = vand.u32 %v86, 4294901760
    %v656 = vsub.f32 %v86, %v655
    %657 = vmatpush2.msra.mxu0 %v656
    %658 = vmatprep.subr.mxu0 0.0
    %v659 = vand.u32 %v85, 4294901760
    %v660 = vsub.f32 %v85, %v659
    %661 = vmatpush2.msra.mxu0 %v660
    %662 = vmatprep.subr.mxu0 0.0
    %v663 = vand.u32 %v84, 4294901760
    %v664 = vsub.f32 %v84, %v663
    %665 = vmatpush2.msra.mxu0 %v664
    %666 = vmatprep.subr.mxu0 0.0
    %v667 = vand.u32 %v83, 4294901760
    %v668 = vsub.f32 %v83, %v667
    %669 = vmatpush2.msra.mxu0 %v668
    %670 = vmatprep.subr.mxu0 0.0
    %v671 = vand.u32 %v82, 4294901760
    %v672 = vsub.f32 %v82, %v671
    %673 = vmatpush2.msra.mxu0 %v672
    %674 = vmatprep.subr.mxu0 0.0
    %v675 = vand.u32 %v81, 4294901760
    %v676 = vsub.f32 %v81, %v675
    %677 = vmatpush2.msra.mxu0 %v676
    %678 = vmatprep.subr.mxu0 0.0
    %v679 = vand.u32 %v80, 4294901760
    %v680 = vsub.f32 %v80, %v679
    %681 = vmatpush2.msra.mxu0 %v680
    %v682 = vand.u32 %v129, 4294901760
    %v683 = vsub.f32 %v129, %v682
    %684 = vmatprep.mubr.f32.mxu0 %v683
    %v685 = vand.u32 %v128, 4294901760
    %v686 = vsub.f32 %v128, %v685
    %687 = vmatmul.mubr.f32.gmra.mxu0 %v686
    %v688 = vpop.f32.mrf.mxu0
    %v689 = vadd.f32 %v530, %v688
    %v690 = vpop.f32.mrf.mxu0
    %v691 = vand.u32 %v133, 4294901760
    %v692 = vsub.f32 %v133, %v691
    %693 = vmatprep.mubr.f32.mxu0 %v692
    %v694 = vand.u32 %v132, 4294901760
    %v695 = vsub.f32 %v132, %v694
    %696 = vmatmul.mubr.f32.gmra.mxu0 %v695
    %v697 = vpop.f32.mrf.mxu0
    %v698 = vadd.f32 %v537, %v697
    %v699 = vpop.f32.mrf.mxu0
    %v700 = vand.u32 %v137, 4294901760
    %v701 = vsub.f32 %v137, %v700
    %702 = vmatprep.mubr.f32.mxu0 %v701
    %v703 = vand.u32 %v136, 4294901760
    %v704 = vsub.f32 %v136, %v703
    %705 = vmatmul.mubr.f32.gmra.mxu0 %v704
    %v706 = vpop.f32.mrf.mxu0
    %v707 = vadd.f32 %v544, %v706
    %v708 = vpop.f32.mrf.mxu0
    %v709 = vand.u32 %v141, 4294901760
    %v710 = vsub.f32 %v141, %v709
    %711 = vmatprep.mubr.f32.mxu0 %v710
    %v712 = vand.u32 %v140, 4294901760
    %v713 = vsub.f32 %v140, %v712
    %714 = vmatmul.mubr.f32.gmra.mxu0 %v713
    %v715 = vpop.f32.mrf.mxu0
    %v716 = vadd.f32 %v551, %v715
    %v717 = vpop.f32.mrf.mxu0
    %718 = vdwg.mxu0
    %719 = vmatprep.subr.mxu0 0.0
    %v720 = vand.u32 %v79, 4294901760
    %721 = vmatpush1.msra.mxu0 %v720
    %722 = vmatprep.subr.mxu0 0.0
    %v723 = vand.u32 %v78, 4294901760
    %724 = vmatpush1.msra.mxu0 %v723
    %725 = vmatprep.subr.mxu0 0.0
    %v726 = vand.u32 %v77, 4294901760
    %727 = vmatpush1.msra.mxu0 %v726
    %728 = vmatprep.subr.mxu0 0.0
    %v729 = vand.u32 %v76, 4294901760
    %730 = vmatpush1.msra.mxu0 %v729
    %731 = vmatprep.subr.mxu0 0.0
    %v732 = vand.u32 %v75, 4294901760
    %733 = vmatpush1.msra.mxu0 %v732
    %734 = vmatprep.subr.mxu0 0.0
    %v735 = vand.u32 %v74, 4294901760
    %736 = vmatpush1.msra.mxu0 %v735
    %737 = vmatprep.subr.mxu0 0.0
    %v738 = vand.u32 %v73, 4294901760
    %739 = vmatpush1.msra.mxu0 %v738
    %740 = vmatprep.subr.mxu0 0.0
    %v741 = vand.u32 %v72, 4294901760
    %742 = vmatpush1.msra.mxu0 %v741
    %743 = vmatprep.subr.mxu0 0.0
    %v744 = vand.u32 %v71, 4294901760
    %745 = vmatpush1.msra.mxu0 %v744
    %746 = vmatprep.subr.mxu0 0.0
    %v747 = vand.u32 %v70, 4294901760
    %748 = vmatpush1.msra.mxu0 %v747
    %749 = vmatprep.subr.mxu0 0.0
    %v750 = vand.u32 %v69, 4294901760
    %751 = vmatpush1.msra.mxu0 %v750
    %752 = vmatprep.subr.mxu0 0.0
    %v753 = vand.u32 %v68, 4294901760
    %754 = vmatpush1.msra.mxu0 %v753
    %755 = vmatprep.subr.mxu0 0.0
    %v756 = vand.u32 %v67, 4294901760
    %757 = vmatpush1.msra.mxu0 %v756
    %758 = vmatprep.subr.mxu0 0.0
    %v759 = vand.u32 %v66, 4294901760
    %760 = vmatpush1.msra.mxu0 %v759
    %761 = vmatprep.subr.mxu0 0.0
    %v762 = vand.u32 %v65, 4294901760
    %763 = vmatpush1.msra.mxu0 %v762
    %764 = vmatprep.subr.mxu0 0.0
    %v765 = vand.u32 %v64, 4294901760
    %766 = vmatpush1.msra.mxu0 %v765
    %767 = vmatprep.subr.mxu0 0.0
    %v768 = vand.u32 %v95, 4294901760
    %769 = vmatpush2.msra.mxu0 %v768
    %770 = vmatprep.subr.mxu0 0.0
    %v771 = vand.u32 %v94, 4294901760
    %772 = vmatpush2.msra.mxu0 %v771
    %773 = vmatprep.subr.mxu0 0.0
    %v774 = vand.u32 %v93, 4294901760
    %775 = vmatpush2.msra.mxu0 %v774
    %776 = vmatprep.subr.mxu0 0.0
    %v777 = vand.u32 %v92, 4294901760
    %778 = vmatpush2.msra.mxu0 %v777
    %779 = vmatprep.subr.mxu0 0.0
    %v780 = vand.u32 %v91, 4294901760
    %781 = vmatpush2.msra.mxu0 %v780
    %782 = vmatprep.subr.mxu0 0.0
    %v783 = vand.u32 %v90, 4294901760
    %784 = vmatpush2.msra.mxu0 %v783
    %785 = vmatprep.subr.mxu0 0.0
    %v786 = vand.u32 %v89, 4294901760
    %787 = vmatpush2.msra.mxu0 %v786
    %788 = vmatprep.subr.mxu0 0.0
    %v789 = vand.u32 %v88, 4294901760
    %790 = vmatpush2.msra.mxu0 %v789
    %791 = vmatprep.subr.mxu0 0.0
    %v792 = vand.u32 %v87, 4294901760
    %793 = vmatpush2.msra.mxu0 %v792
    %794 = vmatprep.subr.mxu0 0.0
    %v795 = vand.u32 %v86, 4294901760
    %796 = vmatpush2.msra.mxu0 %v795
    %797 = vmatprep.subr.mxu0 0.0
    %v798 = vand.u32 %v85, 4294901760
    %799 = vmatpush2.msra.mxu0 %v798
    %800 = vmatprep.subr.mxu0 0.0
    %v801 = vand.u32 %v84, 4294901760
    %802 = vmatpush2.msra.mxu0 %v801
    %803 = vmatprep.subr.mxu0 0.0
    %v804 = vand.u32 %v83, 4294901760
    %805 = vmatpush2.msra.mxu0 %v804
    %806 = vmatprep.subr.mxu0 0.0
    %v807 = vand.u32 %v82, 4294901760
    %808 = vmatpush2.msra.mxu0 %v807
    %809 = vmatprep.subr.mxu0 0.0
    %v810 = vand.u32 %v81, 4294901760
    %811 = vmatpush2.msra.mxu0 %v810
    %812 = vmatprep.subr.mxu0 0.0
    %v813 = vand.u32 %v80, 4294901760
    %814 = vmatpush2.msra.mxu0 %v813
    %v815 = vand.u32 %v129, 4294901760
    %v816 = vsub.f32 %v129, %v815
    %v817 = vand.u32 %v816, 4294901760
    %818 = vmatprep.mubr.f32.mxu0 %v817
    %v819 = vand.u32 %v128, 4294901760
    %v820 = vsub.f32 %v128, %v819
    %v821 = vand.u32 %v820, 4294901760
    %822 = vmatmul.mubr.f32.gmra.mxu0 %v821
    %v823 = vpop.f32.mrf.mxu0
    %v824 = vadd.f32 %v689, %v823
    %v825 = vpop.f32.mrf.mxu0
    %v826 = vand.u32 %v133, 4294901760
    %v827 = vsub.f32 %v133, %v826
    %v828 = vand.u32 %v827, 4294901760
    %829 = vmatprep.mubr.f32.mxu0 %v828
    %v830 = vand.u32 %v132, 4294901760
    %v831 = vsub.f32 %v132, %v830
    %v832 = vand.u32 %v831, 4294901760
    %833 = vmatmul.mubr.f32.gmra.mxu0 %v832
    %v834 = vpop.f32.mrf.mxu0
    %v835 = vadd.f32 %v698, %v834
    %v836 = vpop.f32.mrf.mxu0
    %v837 = vand.u32 %v137, 4294901760
    %v838 = vsub.f32 %v137, %v837
    %v839 = vand.u32 %v838, 4294901760
    %840 = vmatprep.mubr.f32.mxu0 %v839
    %v841 = vand.u32 %v136, 4294901760
    %v842 = vsub.f32 %v136, %v841
    %v843 = vand.u32 %v842, 4294901760
    %844 = vmatmul.mubr.f32.gmra.mxu0 %v843
    %v845 = vpop.f32.mrf.mxu0
    %v846 = vadd.f32 %v707, %v845
    %v847 = vpop.f32.mrf.mxu0
    %v848 = vand.u32 %v141, 4294901760
    %v849 = vsub.f32 %v141, %v848
    %v850 = vand.u32 %v849, 4294901760
    %851 = vmatprep.mubr.f32.mxu0 %v850
    %v852 = vand.u32 %v140, 4294901760
    %v853 = vsub.f32 %v140, %v852
    %v854 = vand.u32 %v853, 4294901760
    %855 = vmatmul.mubr.f32.gmra.mxu0 %v854
    %v856 = vpop.f32.mrf.mxu0
    %v857 = vadd.f32 %v716, %v856
    %v858 = vpop.f32.mrf.mxu0
    %859 = vdwg.mxu0
    %860 = vmatprep.subr.mxu0 0.0
    %v861 = vand.u32 %v79, 4294901760
    %v862 = vsub.f32 %v79, %v861
    %v863 = vand.u32 %v862, 4294901760
    %864 = vmatpush1.msra.mxu0 %v863
    %865 = vmatprep.subr.mxu0 0.0
    %v866 = vand.u32 %v78, 4294901760
    %v867 = vsub.f32 %v78, %v866
    %v868 = vand.u32 %v867, 4294901760
    %869 = vmatpush1.msra.mxu0 %v868
    %870 = vmatprep.subr.mxu0 0.0
    %v871 = vand.u32 %v77, 4294901760
    %v872 = vsub.f32 %v77, %v871
    %v873 = vand.u32 %v872, 4294901760
    %874 = vmatpush1.msra.mxu0 %v873
    %875 = vmatprep.subr.mxu0 0.0
    %v876 = vand.u32 %v76, 4294901760
    %v877 = vsub.f32 %v76, %v876
    %v878 = vand.u32 %v877, 4294901760
    %879 = vmatpush1.msra.mxu0 %v878
    %880 = vmatprep.subr.mxu0 0.0
    %v881 = vand.u32 %v75, 4294901760
    %v882 = vsub.f32 %v75, %v881
    %v883 = vand.u32 %v882, 4294901760
    %884 = vmatpush1.msra.mxu0 %v883
    %885 = vmatprep.subr.mxu0 0.0
    %v886 = vand.u32 %v74, 4294901760
    %v887 = vsub.f32 %v74, %v886
    %v888 = vand.u32 %v887, 4294901760
    %889 = vmatpush1.msra.mxu0 %v888
    %890 = vmatprep.subr.mxu0 0.0
    %v891 = vand.u32 %v73, 4294901760
    %v892 = vsub.f32 %v73, %v891
    %v893 = vand.u32 %v892, 4294901760
    %894 = vmatpush1.msra.mxu0 %v893
    %895 = vmatprep.subr.mxu0 0.0
    %v896 = vand.u32 %v72, 4294901760
    %v897 = vsub.f32 %v72, %v896
    %v898 = vand.u32 %v897, 4294901760
    %899 = vmatpush1.msra.mxu0 %v898
    %900 = vmatprep.subr.mxu0 0.0
    %v901 = vand.u32 %v71, 4294901760
    %v902 = vsub.f32 %v71, %v901
    %v903 = vand.u32 %v902, 4294901760
    %904 = vmatpush1.msra.mxu0 %v903
    %905 = vmatprep.subr.mxu0 0.0
    %v906 = vand.u32 %v70, 4294901760
    %v907 = vsub.f32 %v70, %v906
    %v908 = vand.u32 %v907, 4294901760
    %909 = vmatpush1.msra.mxu0 %v908
    %910 = vmatprep.subr.mxu0 0.0
    %v911 = vand.u32 %v69, 4294901760
    %v912 = vsub.f32 %v69, %v911
    %v913 = vand.u32 %v912, 4294901760
    %914 = vmatpush1.msra.mxu0 %v913
    %915 = vmatprep.subr.mxu0 0.0
    %v916 = vand.u32 %v68, 4294901760
    %v917 = vsub.f32 %v68, %v916
    %v918 = vand.u32 %v917, 4294901760
    %919 = vmatpush1.msra.mxu0 %v918
    %920 = vmatprep.subr.mxu0 0.0
    %v921 = vand.u32 %v67, 4294901760
    %v922 = vsub.f32 %v67, %v921
    %v923 = vand.u32 %v922, 4294901760
    %924 = vmatpush1.msra.mxu0 %v923
    %925 = vmatprep.subr.mxu0 0.0
    %v926 = vand.u32 %v66, 4294901760
    %v927 = vsub.f32 %v66, %v926
    %v928 = vand.u32 %v927, 4294901760
    %929 = vmatpush1.msra.mxu0 %v928
    %930 = vmatprep.subr.mxu0 0.0
    %v931 = vand.u32 %v65, 4294901760
    %v932 = vsub.f32 %v65, %v931
    %v933 = vand.u32 %v932, 4294901760
    %934 = vmatpush1.msra.mxu0 %v933
    %935 = vmatprep.subr.mxu0 0.0
    %v936 = vand.u32 %v64, 4294901760
    %v937 = vsub.f32 %v64, %v936
    %v938 = vand.u32 %v937, 4294901760
    %939 = vmatpush1.msra.mxu0 %v938
    %940 = vmatprep.subr.mxu0 0.0
    %v941 = vand.u32 %v95, 4294901760
    %v942 = vsub.f32 %v95, %v941
    %v943 = vand.u32 %v942, 4294901760
    %944 = vmatpush2.msra.mxu0 %v943
    %945 = vmatprep.subr.mxu0 0.0
    %v946 = vand.u32 %v94, 4294901760
    %v947 = vsub.f32 %v94, %v946
    %v948 = vand.u32 %v947, 4294901760
    %949 = vmatpush2.msra.mxu0 %v948
    %950 = vmatprep.subr.mxu0 0.0
    %v951 = vand.u32 %v93, 4294901760
    %v952 = vsub.f32 %v93, %v951
    %v953 = vand.u32 %v952, 4294901760
    %954 = vmatpush2.msra.mxu0 %v953
    %955 = vmatprep.subr.mxu0 0.0
    %v956 = vand.u32 %v92, 4294901760
    %v957 = vsub.f32 %v92, %v956
    %v958 = vand.u32 %v957, 4294901760
    %959 = vmatpush2.msra.mxu0 %v958
    %960 = vmatprep.subr.mxu0 0.0
    %v961 = vand.u32 %v91, 4294901760
    %v962 = vsub.f32 %v91, %v961
    %v963 = vand.u32 %v962, 4294901760
    %964 = vmatpush2.msra.mxu0 %v963
    %965 = vmatprep.subr.mxu0 0.0
    %v966 = vand.u32 %v90, 4294901760
    %v967 = vsub.f32 %v90, %v966
    %v968 = vand.u32 %v967, 4294901760
    %969 = vmatpush2.msra.mxu0 %v968
    %970 = vmatprep.subr.mxu0 0.0
    %v971 = vand.u32 %v89, 4294901760
    %v972 = vsub.f32 %v89, %v971
    %v973 = vand.u32 %v972, 4294901760
    %974 = vmatpush2.msra.mxu0 %v973
    %975 = vmatprep.subr.mxu0 0.0
    %v976 = vand.u32 %v88, 4294901760
    %v977 = vsub.f32 %v88, %v976
    %v978 = vand.u32 %v977, 4294901760
    %979 = vmatpush2.msra.mxu0 %v978
    %980 = vmatprep.subr.mxu0 0.0
    %v981 = vand.u32 %v87, 4294901760
    %v982 = vsub.f32 %v87, %v981
    %v983 = vand.u32 %v982, 4294901760
    %984 = vmatpush2.msra.mxu0 %v983
    %985 = vmatprep.subr.mxu0 0.0
    %v986 = vand.u32 %v86, 4294901760
    %v987 = vsub.f32 %v86, %v986
    %v988 = vand.u32 %v987, 4294901760
    %989 = vmatpush2.msra.mxu0 %v988
    %990 = vmatprep.subr.mxu0 0.0
    %v991 = vand.u32 %v85, 4294901760
    %v992 = vsub.f32 %v85, %v991
    %v993 = vand.u32 %v992, 4294901760
    %994 = vmatpush2.msra.mxu0 %v993
    %995 = vmatprep.subr.mxu0 0.0
    %v996 = vand.u32 %v84, 4294901760
    %v997 = vsub.f32 %v84, %v996
    %v998 = vand.u32 %v997, 4294901760
    %999 = vmatpush2.msra.mxu0 %v998
    %1000 = vmatprep.subr.mxu0 0.0
    %v1001 = vand.u32 %v83, 4294901760
    %v1002 = vsub.f32 %v83, %v1001
    %v1003 = vand.u32 %v1002, 4294901760
    %1004 = vmatpush2.msra.mxu0 %v1003
    %1005 = vmatprep.subr.mxu0 0.0
    %v1006 = vand.u32 %v82, 4294901760
    %v1007 = vsub.f32 %v82, %v1006
    %v1008 = vand.u32 %v1007, 4294901760
    %1009 = vmatpush2.msra.mxu0 %v1008
    %1010 = vmatprep.subr.mxu0 0.0
    %v1011 = vand.u32 %v81, 4294901760
    %v1012 = vsub.f32 %v81, %v1011
    %v1013 = vand.u32 %v1012, 4294901760
    %1014 = vmatpush2.msra.mxu0 %v1013
    %1015 = vmatprep.subr.mxu0 0.0
    %v1016 = vand.u32 %v80, 4294901760
    %v1017 = vsub.f32 %v80, %v1016
    %v1018 = vand.u32 %v1017, 4294901760
    %1019 = vmatpush2.msra.mxu0 %v1018
    %v1020 = vand.u32 %v129, 4294901760
    %1021 = vmatprep.mubr.f32.mxu0 %v1020
    %v1022 = vand.u32 %v128, 4294901760
    %1023 = vmatmul.mubr.f32.gmra.mxu0 %v1022
    %v1024 = vpop.f32.mrf.mxu0
    %v1025 = vadd.f32 %v824, %v1024
    %v1026 = vpop.f32.mrf.mxu0
    %v1027 = vand.u32 %v133, 4294901760
    %1028 = vmatprep.mubr.f32.mxu0 %v1027
    %v1029 = vand.u32 %v132, 4294901760
    %1030 = vmatmul.mubr.f32.gmra.mxu0 %v1029
    %v1031 = vpop.f32.mrf.mxu0
    %v1032 = vadd.f32 %v835, %v1031
    %v1033 = vpop.f32.mrf.mxu0
    %v1034 = vand.u32 %v137, 4294901760
    %1035 = vmatprep.mubr.f32.mxu0 %v1034
    %v1036 = vand.u32 %v136, 4294901760
    %1037 = vmatmul.mubr.f32.gmra.mxu0 %v1036
    %v1038 = vpop.f32.mrf.mxu0
    %v1039 = vadd.f32 %v846, %v1038
    %v1040 = vpop.f32.mrf.mxu0
    %v1041 = vand.u32 %v141, 4294901760
    %1042 = vmatprep.mubr.f32.mxu0 %v1041
    %v1043 = vand.u32 %v140, 4294901760
    %1044 = vmatmul.mubr.f32.gmra.mxu0 %v1043
    %v1045 = vpop.f32.mrf.mxu0
    %v1046 = vadd.f32 %v857, %v1045
    %v1047 = vpop.f32.mrf.mxu0
    %1048 = vdwg.mxu0
    %1049 = vmatprep.subr.mxu0 0.0
    %v1050 = vand.u32 %v79, 4294901760
    %1051 = vmatpush1.msra.mxu0 %v1050
    %1052 = vmatprep.subr.mxu0 0.0
    %v1053 = vand.u32 %v78, 4294901760
    %1054 = vmatpush1.msra.mxu0 %v1053
    %1055 = vmatprep.subr.mxu0 0.0
    %v1056 = vand.u32 %v77, 4294901760
    %1057 = vmatpush1.msra.mxu0 %v1056
    %1058 = vmatprep.subr.mxu0 0.0
    %v1059 = vand.u32 %v76, 4294901760
    %1060 = vmatpush1.msra.mxu0 %v1059
    %1061 = vmatprep.subr.mxu0 0.0
    %v1062 = vand.u32 %v75, 4294901760
    %1063 = vmatpush1.msra.mxu0 %v1062
    %1064 = vmatprep.subr.mxu0 0.0
    %v1065 = vand.u32 %v74, 4294901760
    %1066 = vmatpush1.msra.mxu0 %v1065
    %1067 = vmatprep.subr.mxu0 0.0
    %v1068 = vand.u32 %v73, 4294901760
    %1069 = vmatpush1.msra.mxu0 %v1068
    %1070 = vmatprep.subr.mxu0 0.0
    %v1071 = vand.u32 %v72, 4294901760
    %1072 = vmatpush1.msra.mxu0 %v1071
    %1073 = vmatprep.subr.mxu0 0.0
    %v1074 = vand.u32 %v71, 4294901760
    %1075 = vmatpush1.msra.mxu0 %v1074
    %1076 = vmatprep.subr.mxu0 0.0
    %v1077 = vand.u32 %v70, 4294901760
    %1078 = vmatpush1.msra.mxu0 %v1077
    %1079 = vmatprep.subr.mxu0 0.0
    %v1080 = vand.u32 %v69, 4294901760
    %1081 = vmatpush1.msra.mxu0 %v1080
    %1082 = vmatprep.subr.mxu0 0.0
    %v1083 = vand.u32 %v68, 4294901760
    %1084 = vmatpush1.msra.mxu0 %v1083
    %1085 = vmatprep.subr.mxu0 0.0
    %v1086 = vand.u32 %v67, 4294901760
    %1087 = vmatpush1.msra.mxu0 %v1086
    %1088 = vmatprep.subr.mxu0 0.0
    %v1089 = vand.u32 %v66, 4294901760
    %1090 = vmatpush1.msra.mxu0 %v1089
    %1091 = vmatprep.subr.mxu0 0.0
    %v1092 = vand.u32 %v65, 4294901760
    %1093 = vmatpush1.msra.mxu0 %v1092
    %1094 = vmatprep.subr.mxu0 0.0
    %v1095 = vand.u32 %v64, 4294901760
    %1096 = vmatpush1.msra.mxu0 %v1095
    %1097 = vmatprep.subr.mxu0 0.0
    %v1098 = vand.u32 %v95, 4294901760
    %1099 = vmatpush2.msra.mxu0 %v1098
    %1100 = vmatprep.subr.mxu0 0.0
    %v1101 = vand.u32 %v94, 4294901760
    %1102 = vmatpush2.msra.mxu0 %v1101
    %1103 = vmatprep.subr.mxu0 0.0
    %v1104 = vand.u32 %v93, 4294901760
    %1105 = vmatpush2.msra.mxu0 %v1104
    %1106 = vmatprep.subr.mxu0 0.0
    %v1107 = vand.u32 %v92, 4294901760
    %1108 = vmatpush2.msra.mxu0 %v1107
    %1109 = vmatprep.subr.mxu0 0.0
    %v1110 = vand.u32 %v91, 4294901760
    %1111 = vmatpush2.msra.mxu0 %v1110
    %1112 = vmatprep.subr.mxu0 0.0
    %v1113 = vand.u32 %v90, 4294901760
    %1114 = vmatpush2.msra.mxu0 %v1113
    %1115 = vmatprep.subr.mxu0 0.0
    %v1116 = vand.u32 %v89, 4294901760
    %1117 = vmatpush2.msra.mxu0 %v1116
    %1118 = vmatprep.subr.mxu0 0.0
    %v1119 = vand.u32 %v88, 4294901760
    %1120 = vmatpush2.msra.mxu0 %v1119
    %1121 = vmatprep.subr.mxu0 0.0
    %v1122 = vand.u32 %v87, 4294901760
    %1123 = vmatpush2.msra.mxu0 %v1122
    %1124 = vmatprep.subr.mxu0 0.0
    %v1125 = vand.u32 %v86, 4294901760
    %1126 = vmatpush2.msra.mxu0 %v1125
    %1127 = vmatprep.subr.mxu0 0.0
    %v1128 = vand.u32 %v85, 4294901760
    %1129 = vmatpush2.msra.mxu0 %v1128
    %1130 = vmatprep.subr.mxu0 0.0
    %v1131 = vand.u32 %v84, 4294901760
    %1132 = vmatpush2.msra.mxu0 %v1131
    %1133 = vmatprep.subr.mxu0 0.0
    %v1134 = vand.u32 %v83, 4294901760
    %1135 = vmatpush2.msra.mxu0 %v1134
    %1136 = vmatprep.subr.mxu0 0.0
    %v1137 = vand.u32 %v82, 4294901760
    %1138 = vmatpush2.msra.mxu0 %v1137
    %1139 = vmatprep.subr.mxu0 0.0
    %v1140 = vand.u32 %v81, 4294901760
    %1141 = vmatpush2.msra.mxu0 %v1140
    %1142 = vmatprep.subr.mxu0 0.0
    %v1143 = vand.u32 %v80, 4294901760
    %1144 = vmatpush2.msra.mxu0 %v1143
    %v1145 = vand.u32 %v129, 4294901760
    %1146 = vmatprep.mubr.f32.mxu0 %v1145
    %v1147 = vand.u32 %v128, 4294901760
    %1148 = vmatmul.mubr.f32.gmra.mxu0 %v1147
    %v1149 = vpop.f32.mrf.mxu0
    %v1150 = vadd.f32 %v1025, %v1149
    %v1151 = vpop.f32.mrf.mxu0
    %v1152 = vand.u32 %v133, 4294901760
    %1153 = vmatprep.mubr.f32.mxu0 %v1152
    %v1154 = vand.u32 %v132, 4294901760
    %1155 = vmatmul.mubr.f32.gmra.mxu0 %v1154
    %v1156 = vpop.f32.mrf.mxu0
    %v1157 = vadd.f32 %v1032, %v1156
    %v1158 = vpop.f32.mrf.mxu0
    %v1159 = vand.u32 %v137, 4294901760
    %1160 = vmatprep.mubr.f32.mxu0 %v1159
    %v1161 = vand.u32 %v136, 4294901760
    %1162 = vmatmul.mubr.f32.gmra.mxu0 %v1161
    %v1163 = vpop.f32.mrf.mxu0
    %v1164 = vadd.f32 %v1039, %v1163
    %v1165 = vpop.f32.mrf.mxu0
    %v1166 = vand.u32 %v141, 4294901760
    %1167 = vmatprep.mubr.f32.mxu0 %v1166
    %v1168 = vand.u32 %v140, 4294901760
    %1169 = vmatmul.mubr.f32.gmra.mxu0 %v1168
    %v1170 = vpop.f32.mrf.mxu0
    %v1171 = vadd.f32 %v1046, %v1170
    %v1172 = vpop.f32.mrf.mxu0
    %1173 = vdwg.mxu0
    %1174 = vmatprep.subr.mxu0 0.0
    %v1175 = vand.u32 %v111, 4294901760
    %1176 = vmatpush1.msra.mxu0 %v1175
    %1177 = vmatprep.subr.mxu0 0.0
    %v1178 = vand.u32 %v110, 4294901760
    %1179 = vmatpush1.msra.mxu0 %v1178
    %1180 = vmatprep.subr.mxu0 0.0
    %v1181 = vand.u32 %v109, 4294901760
    %1182 = vmatpush1.msra.mxu0 %v1181
    %1183 = vmatprep.subr.mxu0 0.0
    %v1184 = vand.u32 %v108, 4294901760
    %1185 = vmatpush1.msra.mxu0 %v1184
    %1186 = vmatprep.subr.mxu0 0.0
    %v1187 = vand.u32 %v107, 4294901760
    %1188 = vmatpush1.msra.mxu0 %v1187
    %1189 = vmatprep.subr.mxu0 0.0
    %v1190 = vand.u32 %v106, 4294901760
    %1191 = vmatpush1.msra.mxu0 %v1190
    %1192 = vmatprep.subr.mxu0 0.0
    %v1193 = vand.u32 %v105, 4294901760
    %1194 = vmatpush1.msra.mxu0 %v1193
    %1195 = vmatprep.subr.mxu0 0.0
    %v1196 = vand.u32 %v104, 4294901760
    %1197 = vmatpush1.msra.mxu0 %v1196
    %1198 = vmatprep.subr.mxu0 0.0
    %v1199 = vand.u32 %v103, 4294901760
    %1200 = vmatpush1.msra.mxu0 %v1199
    %1201 = vmatprep.subr.mxu0 0.0
    %v1202 = vand.u32 %v102, 4294901760
    %1203 = vmatpush1.msra.mxu0 %v1202
    %1204 = vmatprep.subr.mxu0 0.0
    %v1205 = vand.u32 %v101, 4294901760
    %1206 = vmatpush1.msra.mxu0 %v1205
    %1207 = vmatprep.subr.mxu0 0.0
    %v1208 = vand.u32 %v100, 4294901760
    %1209 = vmatpush1.msra.mxu0 %v1208
    %1210 = vmatprep.subr.mxu0 0.0
    %v1211 = vand.u32 %v99, 4294901760
    %1212 = vmatpush1.msra.mxu0 %v1211
    %1213 = vmatprep.subr.mxu0 0.0
    %v1214 = vand.u32 %v98, 4294901760
    %1215 = vmatpush1.msra.mxu0 %v1214
    %1216 = vmatprep.subr.mxu0 0.0
    %v1217 = vand.u32 %v97, 4294901760
    %1218 = vmatpush1.msra.mxu0 %v1217
    %1219 = vmatprep.subr.mxu0 0.0
    %v1220 = vand.u32 %v96, 4294901760
    %1221 = vmatpush1.msra.mxu0 %v1220
    %1222 = vmatprep.subr.mxu0 0.0
    %v1223 = vand.u32 %v127, 4294901760
    %1224 = vmatpush2.msra.mxu0 %v1223
    %1225 = vmatprep.subr.mxu0 0.0
    %v1226 = vand.u32 %v126, 4294901760
    %1227 = vmatpush2.msra.mxu0 %v1226
    %1228 = vmatprep.subr.mxu0 0.0
    %v1229 = vand.u32 %v125, 4294901760
    %1230 = vmatpush2.msra.mxu0 %v1229
    %1231 = vmatprep.subr.mxu0 0.0
    %v1232 = vand.u32 %v124, 4294901760
    %1233 = vmatpush2.msra.mxu0 %v1232
    %1234 = vmatprep.subr.mxu0 0.0
    %v1235 = vand.u32 %v123, 4294901760
    %1236 = vmatpush2.msra.mxu0 %v1235
    %1237 = vmatprep.subr.mxu0 0.0
    %v1238 = vand.u32 %v122, 4294901760
    %1239 = vmatpush2.msra.mxu0 %v1238
    %1240 = vmatprep.subr.mxu0 0.0
    %v1241 = vand.u32 %v121, 4294901760
    %1242 = vmatpush2.msra.mxu0 %v1241
    %1243 = vmatprep.subr.mxu0 0.0
    %v1244 = vand.u32 %v120, 4294901760
    %1245 = vmatpush2.msra.mxu0 %v1244
    %1246 = vmatprep.subr.mxu0 0.0
    %v1247 = vand.u32 %v119, 4294901760
    %1248 = vmatpush2.msra.mxu0 %v1247
    %1249 = vmatprep.subr.mxu0 0.0
    %v1250 = vand.u32 %v118, 4294901760
    %1251 = vmatpush2.msra.mxu0 %v1250
    %1252 = vmatprep.subr.mxu0 0.0
    %v1253 = vand.u32 %v117, 4294901760
    %1254 = vmatpush2.msra.mxu0 %v1253
    %1255 = vmatprep.subr.mxu0 0.0
    %v1256 = vand.u32 %v116, 4294901760
    %1257 = vmatpush2.msra.mxu0 %v1256
    %1258 = vmatprep.subr.mxu0 0.0
    %v1259 = vand.u32 %v115, 4294901760
    %1260 = vmatpush2.msra.mxu0 %v1259
    %1261 = vmatprep.subr.mxu0 0.0
    %v1262 = vand.u32 %v114, 4294901760
    %1263 = vmatpush2.msra.mxu0 %v1262
    %1264 = vmatprep.subr.mxu0 0.0
    %v1265 = vand.u32 %v113, 4294901760
    %1266 = vmatpush2.msra.mxu0 %v1265
    %1267 = vmatprep.subr.mxu0 0.0
    %v1268 = vand.u32 %v112, 4294901760
    %1269 = vmatpush2.msra.mxu0 %v1268
    %v1270 = vand.u32 %v131, 4294901760
    %v1271 = vsub.f32 %v131, %v1270
    %v1272 = vand.u32 %v1271, 4294901760
    %v1273 = vsub.f32 %v1271, %v1272
    %v1274 = vand.u32 %v1273, 4294901760
    %1275 = vmatprep.mubr.f32.mxu0 %v1274
    %v1276 = vand.u32 %v130, 4294901760
    %v1277 = vsub.f32 %v130, %v1276
    %v1278 = vand.u32 %v1277, 4294901760
    %v1279 = vsub.f32 %v1277, %v1278
    %v1280 = vand.u32 %v1279, 4294901760
    %1281 = vmatmul.mubr.f32.gmra.mxu0 %v1280
    %v1282 = vpop.f32.mrf.mxu0
    %v1283 = vadd.f32 %v1150, %v1282
    %v1284 = vpop.f32.mrf.mxu0
    %v1285 = vand.u32 %v135, 4294901760
    %v1286 = vsub.f32 %v135, %v1285
    %v1287 = vand.u32 %v1286, 4294901760
    %v1288 = vsub.f32 %v1286, %v1287
    %v1289 = vand.u32 %v1288, 4294901760
    %1290 = vmatprep.mubr.f32.mxu0 %v1289
    %v1291 = vand.u32 %v134, 4294901760
    %v1292 = vsub.f32 %v134, %v1291
    %v1293 = vand.u32 %v1292, 4294901760
    %v1294 = vsub.f32 %v1292, %v1293
    %v1295 = vand.u32 %v1294, 4294901760
    %1296 = vmatmul.mubr.f32.gmra.mxu0 %v1295
    %v1297 = vpop.f32.mrf.mxu0
    %v1298 = vadd.f32 %v1157, %v1297
    %v1299 = vpop.f32.mrf.mxu0
    %v1300 = vand.u32 %v139, 4294901760
    %v1301 = vsub.f32 %v139, %v1300
    %v1302 = vand.u32 %v1301, 4294901760
    %v1303 = vsub.f32 %v1301, %v1302
    %v1304 = vand.u32 %v1303, 4294901760
    %1305 = vmatprep.mubr.f32.mxu0 %v1304
    %v1306 = vand.u32 %v138, 4294901760
    %v1307 = vsub.f32 %v138, %v1306
    %v1308 = vand.u32 %v1307, 4294901760
    %v1309 = vsub.f32 %v1307, %v1308
    %v1310 = vand.u32 %v1309, 4294901760
    %1311 = vmatmul.mubr.f32.gmra.mxu0 %v1310
    %v1312 = vpop.f32.mrf.mxu0
    %v1313 = vadd.f32 %v1164, %v1312
    %v1314 = vpop.f32.mrf.mxu0
    %v1315 = vand.u32 %v143, 4294901760
    %v1316 = vsub.f32 %v143, %v1315
    %v1317 = vand.u32 %v1316, 4294901760
    %v1318 = vsub.f32 %v1316, %v1317
    %v1319 = vand.u32 %v1318, 4294901760
    %1320 = vmatprep.mubr.f32.mxu0 %v1319
    %v1321 = vand.u32 %v142, 4294901760
    %v1322 = vsub.f32 %v142, %v1321
    %v1323 = vand.u32 %v1322, 4294901760
    %v1324 = vsub.f32 %v1322, %v1323
    %v1325 = vand.u32 %v1324, 4294901760
    %1326 = vmatmul.mubr.f32.gmra.mxu0 %v1325
    %v1327 = vpop.f32.mrf.mxu0
    %v1328 = vadd.f32 %v1171, %v1327
    %v1329 = vpop.f32.mrf.mxu0
    %1330 = vdwg.mxu0
    %1331 = vmatprep.subr.mxu0 0.0
    %v1332 = vand.u32 %v111, 4294901760
    %v1333 = vsub.f32 %v111, %v1332
    %v1334 = vand.u32 %v1333, 4294901760
    %v1335 = vsub.f32 %v1333, %v1334
    %v1336 = vand.u32 %v1335, 4294901760
    %1337 = vmatpush1.msra.mxu0 %v1336
    %1338 = vmatprep.subr.mxu0 0.0
    %v1339 = vand.u32 %v110, 4294901760
    %v1340 = vsub.f32 %v110, %v1339
    %v1341 = vand.u32 %v1340, 4294901760
    %v1342 = vsub.f32 %v1340, %v1341
    %v1343 = vand.u32 %v1342, 4294901760
    %1344 = vmatpush1.msra.mxu0 %v1343
    %1345 = vmatprep.subr.mxu0 0.0
    %v1346 = vand.u32 %v109, 4294901760
    %v1347 = vsub.f32 %v109, %v1346
    %v1348 = vand.u32 %v1347, 4294901760
    %v1349 = vsub.f32 %v1347, %v1348
    %v1350 = vand.u32 %v1349, 4294901760
    %1351 = vmatpush1.msra.mxu0 %v1350
    %1352 = vmatprep.subr.mxu0 0.0
    %v1353 = vand.u32 %v108, 4294901760
    %v1354 = vsub.f32 %v108, %v1353
    %v1355 = vand.u32 %v1354, 4294901760
    %v1356 = vsub.f32 %v1354, %v1355
    %v1357 = vand.u32 %v1356, 4294901760
    %1358 = vmatpush1.msra.mxu0 %v1357
    %1359 = vmatprep.subr.mxu0 0.0
    %v1360 = vand.u32 %v107, 4294901760
    %v1361 = vsub.f32 %v107, %v1360
    %v1362 = vand.u32 %v1361, 4294901760
    %v1363 = vsub.f32 %v1361, %v1362
    %v1364 = vand.u32 %v1363, 4294901760
    %1365 = vmatpush1.msra.mxu0 %v1364
    %1366 = vmatprep.subr.mxu0 0.0
    %v1367 = vand.u32 %v106, 4294901760
    %v1368 = vsub.f32 %v106, %v1367
    %v1369 = vand.u32 %v1368, 4294901760
    %v1370 = vsub.f32 %v1368, %v1369
    %v1371 = vand.u32 %v1370, 4294901760
    %1372 = vmatpush1.msra.mxu0 %v1371
    %1373 = vmatprep.subr.mxu0 0.0
    %v1374 = vand.u32 %v105, 4294901760
    %v1375 = vsub.f32 %v105, %v1374
    %v1376 = vand.u32 %v1375, 4294901760
    %v1377 = vsub.f32 %v1375, %v1376
    %v1378 = vand.u32 %v1377, 4294901760
    %1379 = vmatpush1.msra.mxu0 %v1378
    %1380 = vmatprep.subr.mxu0 0.0
    %v1381 = vand.u32 %v104, 4294901760
    %v1382 = vsub.f32 %v104, %v1381
    %v1383 = vand.u32 %v1382, 4294901760
    %v1384 = vsub.f32 %v1382, %v1383
    %v1385 = vand.u32 %v1384, 4294901760
    %1386 = vmatpush1.msra.mxu0 %v1385
    %1387 = vmatprep.subr.mxu0 0.0
    %v1388 = vand.u32 %v103, 4294901760
    %v1389 = vsub.f32 %v103, %v1388
    %v1390 = vand.u32 %v1389, 4294901760
    %v1391 = vsub.f32 %v1389, %v1390
    %v1392 = vand.u32 %v1391, 4294901760
    %1393 = vmatpush1.msra.mxu0 %v1392
    %1394 = vmatprep.subr.mxu0 0.0
    %v1395 = vand.u32 %v102, 4294901760
    %v1396 = vsub.f32 %v102, %v1395
    %v1397 = vand.u32 %v1396, 4294901760
    %v1398 = vsub.f32 %v1396, %v1397
    %v1399 = vand.u32 %v1398, 4294901760
    %1400 = vmatpush1.msra.mxu0 %v1399
    %1401 = vmatprep.subr.mxu0 0.0
    %v1402 = vand.u32 %v101, 4294901760
    %v1403 = vsub.f32 %v101, %v1402
    %v1404 = vand.u32 %v1403, 4294901760
    %v1405 = vsub.f32 %v1403, %v1404
    %v1406 = vand.u32 %v1405, 4294901760
    %1407 = vmatpush1.msra.mxu0 %v1406
    %1408 = vmatprep.subr.mxu0 0.0
    %v1409 = vand.u32 %v100, 4294901760
    %v1410 = vsub.f32 %v100, %v1409
    %v1411 = vand.u32 %v1410, 4294901760
    %v1412 = vsub.f32 %v1410, %v1411
    %v1413 = vand.u32 %v1412, 4294901760
    %1414 = vmatpush1.msra.mxu0 %v1413
    %1415 = vmatprep.subr.mxu0 0.0
    %v1416 = vand.u32 %v99, 4294901760
    %v1417 = vsub.f32 %v99, %v1416
    %v1418 = vand.u32 %v1417, 4294901760
    %v1419 = vsub.f32 %v1417, %v1418
    %v1420 = vand.u32 %v1419, 4294901760
    %1421 = vmatpush1.msra.mxu0 %v1420
    %1422 = vmatprep.subr.mxu0 0.0
    %v1423 = vand.u32 %v98, 4294901760
    %v1424 = vsub.f32 %v98, %v1423
    %v1425 = vand.u32 %v1424, 4294901760
    %v1426 = vsub.f32 %v1424, %v1425
    %v1427 = vand.u32 %v1426, 4294901760
    %1428 = vmatpush1.msra.mxu0 %v1427
    %1429 = vmatprep.subr.mxu0 0.0
    %v1430 = vand.u32 %v97, 4294901760
    %v1431 = vsub.f32 %v97, %v1430
    %v1432 = vand.u32 %v1431, 4294901760
    %v1433 = vsub.f32 %v1431, %v1432
    %v1434 = vand.u32 %v1433, 4294901760
    %1435 = vmatpush1.msra.mxu0 %v1434
    %1436 = vmatprep.subr.mxu0 0.0
    %v1437 = vand.u32 %v96, 4294901760
    %v1438 = vsub.f32 %v96, %v1437
    %v1439 = vand.u32 %v1438, 4294901760
    %v1440 = vsub.f32 %v1438, %v1439
    %v1441 = vand.u32 %v1440, 4294901760
    %1442 = vmatpush1.msra.mxu0 %v1441
    %1443 = vmatprep.subr.mxu0 0.0
    %v1444 = vand.u32 %v127, 4294901760
    %v1445 = vsub.f32 %v127, %v1444
    %v1446 = vand.u32 %v1445, 4294901760
    %v1447 = vsub.f32 %v1445, %v1446
    %v1448 = vand.u32 %v1447, 4294901760
    %1449 = vmatpush2.msra.mxu0 %v1448
    %1450 = vmatprep.subr.mxu0 0.0
    %v1451 = vand.u32 %v126, 4294901760
    %v1452 = vsub.f32 %v126, %v1451
    %v1453 = vand.u32 %v1452, 4294901760
    %v1454 = vsub.f32 %v1452, %v1453
    %v1455 = vand.u32 %v1454, 4294901760
    %1456 = vmatpush2.msra.mxu0 %v1455
    %1457 = vmatprep.subr.mxu0 0.0
    %v1458 = vand.u32 %v125, 4294901760
    %v1459 = vsub.f32 %v125, %v1458
    %v1460 = vand.u32 %v1459, 4294901760
    %v1461 = vsub.f32 %v1459, %v1460
    %v1462 = vand.u32 %v1461, 4294901760
    %1463 = vmatpush2.msra.mxu0 %v1462
    %1464 = vmatprep.subr.mxu0 0.0
    %v1465 = vand.u32 %v124, 4294901760
    %v1466 = vsub.f32 %v124, %v1465
    %v1467 = vand.u32 %v1466, 4294901760
    %v1468 = vsub.f32 %v1466, %v1467
    %v1469 = vand.u32 %v1468, 4294901760
    %1470 = vmatpush2.msra.mxu0 %v1469
    %1471 = vmatprep.subr.mxu0 0.0
    %v1472 = vand.u32 %v123, 4294901760
    %v1473 = vsub.f32 %v123, %v1472
    %v1474 = vand.u32 %v1473, 4294901760
    %v1475 = vsub.f32 %v1473, %v1474
    %v1476 = vand.u32 %v1475, 4294901760
    %1477 = vmatpush2.msra.mxu0 %v1476
    %1478 = vmatprep.subr.mxu0 0.0
    %v1479 = vand.u32 %v122, 4294901760
    %v1480 = vsub.f32 %v122, %v1479
    %v1481 = vand.u32 %v1480, 4294901760
    %v1482 = vsub.f32 %v1480, %v1481
    %v1483 = vand.u32 %v1482, 4294901760
    %1484 = vmatpush2.msra.mxu0 %v1483
    %1485 = vmatprep.subr.mxu0 0.0
    %v1486 = vand.u32 %v121, 4294901760
    %v1487 = vsub.f32 %v121, %v1486
    %v1488 = vand.u32 %v1487, 4294901760
    %v1489 = vsub.f32 %v1487, %v1488
    %v1490 = vand.u32 %v1489, 4294901760
    %1491 = vmatpush2.msra.mxu0 %v1490
    %1492 = vmatprep.subr.mxu0 0.0
    %v1493 = vand.u32 %v120, 4294901760
    %v1494 = vsub.f32 %v120, %v1493
    %v1495 = vand.u32 %v1494, 4294901760
    %v1496 = vsub.f32 %v1494, %v1495
    %v1497 = vand.u32 %v1496, 4294901760
    %1498 = vmatpush2.msra.mxu0 %v1497
    %1499 = vmatprep.subr.mxu0 0.0
    %v1500 = vand.u32 %v119, 4294901760
    %v1501 = vsub.f32 %v119, %v1500
    %v1502 = vand.u32 %v1501, 4294901760
    %v1503 = vsub.f32 %v1501, %v1502
    %v1504 = vand.u32 %v1503, 4294901760
    %1505 = vmatpush2.msra.mxu0 %v1504
    %1506 = vmatprep.subr.mxu0 0.0
    %v1507 = vand.u32 %v118, 4294901760
    %v1508 = vsub.f32 %v118, %v1507
    %v1509 = vand.u32 %v1508, 4294901760
    %v1510 = vsub.f32 %v1508, %v1509
    %v1511 = vand.u32 %v1510, 4294901760
    %1512 = vmatpush2.msra.mxu0 %v1511
    %1513 = vmatprep.subr.mxu0 0.0
    %v1514 = vand.u32 %v117, 4294901760
    %v1515 = vsub.f32 %v117, %v1514
    %v1516 = vand.u32 %v1515, 4294901760
    %v1517 = vsub.f32 %v1515, %v1516
    %v1518 = vand.u32 %v1517, 4294901760
    %1519 = vmatpush2.msra.mxu0 %v1518
    %1520 = vmatprep.subr.mxu0 0.0
    %v1521 = vand.u32 %v116, 4294901760
    %v1522 = vsub.f32 %v116, %v1521
    %v1523 = vand.u32 %v1522, 4294901760
    %v1524 = vsub.f32 %v1522, %v1523
    %v1525 = vand.u32 %v1524, 4294901760
    %1526 = vmatpush2.msra.mxu0 %v1525
    %1527 = vmatprep.subr.mxu0 0.0
    %v1528 = vand.u32 %v115, 4294901760
    %v1529 = vsub.f32 %v115, %v1528
    %v1530 = vand.u32 %v1529, 4294901760
    %v1531 = vsub.f32 %v1529, %v1530
    %v1532 = vand.u32 %v1531, 4294901760
    %1533 = vmatpush2.msra.mxu0 %v1532
    %1534 = vmatprep.subr.mxu0 0.0
    %v1535 = vand.u32 %v114, 4294901760
    %v1536 = vsub.f32 %v114, %v1535
    %v1537 = vand.u32 %v1536, 4294901760
    %v1538 = vsub.f32 %v1536, %v1537
    %v1539 = vand.u32 %v1538, 4294901760
    %1540 = vmatpush2.msra.mxu0 %v1539
    %1541 = vmatprep.subr.mxu0 0.0
    %v1542 = vand.u32 %v113, 4294901760
    %v1543 = vsub.f32 %v113, %v1542
    %v1544 = vand.u32 %v1543, 4294901760
    %v1545 = vsub.f32 %v1543, %v1544
    %v1546 = vand.u32 %v1545, 4294901760
    %1547 = vmatpush2.msra.mxu0 %v1546
    %1548 = vmatprep.subr.mxu0 0.0
    %v1549 = vand.u32 %v112, 4294901760
    %v1550 = vsub.f32 %v112, %v1549
    %v1551 = vand.u32 %v1550, 4294901760
    %v1552 = vsub.f32 %v1550, %v1551
    %v1553 = vand.u32 %v1552, 4294901760
    %1554 = vmatpush2.msra.mxu0 %v1553
    %v1555 = vand.u32 %v131, 4294901760
    %1556 = vmatprep.mubr.f32.mxu0 %v1555
    %v1557 = vand.u32 %v130, 4294901760
    %1558 = vmatmul.mubr.f32.gmra.mxu0 %v1557
    %v1559 = vpop.f32.mrf.mxu0
    %v1560 = vadd.f32 %v1283, %v1559
    %v1561 = vpop.f32.mrf.mxu0
    %v1562 = vand.u32 %v135, 4294901760
    %1563 = vmatprep.mubr.f32.mxu0 %v1562
    %v1564 = vand.u32 %v134, 4294901760
    %1565 = vmatmul.mubr.f32.gmra.mxu0 %v1564
    %v1566 = vpop.f32.mrf.mxu0
    %v1567 = vadd.f32 %v1298, %v1566
    %v1568 = vpop.f32.mrf.mxu0
    %v1569 = vand.u32 %v139, 4294901760
    %1570 = vmatprep.mubr.f32.mxu0 %v1569
    %v1571 = vand.u32 %v138, 4294901760
    %1572 = vmatmul.mubr.f32.gmra.mxu0 %v1571
    %v1573 = vpop.f32.mrf.mxu0
    %v1574 = vadd.f32 %v1313, %v1573
    %v1575 = vpop.f32.mrf.mxu0
    %v1576 = vand.u32 %v143, 4294901760
    %1577 = vmatprep.mubr.f32.mxu0 %v1576
    %v1578 = vand.u32 %v142, 4294901760
    %1579 = vmatmul.mubr.f32.gmra.mxu0 %v1578
    %v1580 = vpop.f32.mrf.mxu0
    %v1581 = vadd.f32 %v1328, %v1580
    %v1582 = vpop.f32.mrf.mxu0
    %1583 = vdwg.mxu0
    %1584 = vmatprep.subr.mxu0 0.0
    %v1585 = vand.u32 %v111, 4294901760
    %v1586 = vsub.f32 %v111, %v1585
    %1587 = vmatpush1.msra.mxu0 %v1586
    %1588 = vmatprep.subr.mxu0 0.0
    %v1589 = vand.u32 %v110, 4294901760
    %v1590 = vsub.f32 %v110, %v1589
    %1591 = vmatpush1.msra.mxu0 %v1590
    %1592 = vmatprep.subr.mxu0 0.0
    %v1593 = vand.u32 %v109, 4294901760
    %v1594 = vsub.f32 %v109, %v1593
    %1595 = vmatpush1.msra.mxu0 %v1594
    %1596 = vmatprep.subr.mxu0 0.0
    %v1597 = vand.u32 %v108, 4294901760
    %v1598 = vsub.f32 %v108, %v1597
    %1599 = vmatpush1.msra.mxu0 %v1598
    %1600 = vmatprep.subr.mxu0 0.0
    %v1601 = vand.u32 %v107, 4294901760
    %v1602 = vsub.f32 %v107, %v1601
    %1603 = vmatpush1.msra.mxu0 %v1602
    %1604 = vmatprep.subr.mxu0 0.0
    %v1605 = vand.u32 %v106, 4294901760
    %v1606 = vsub.f32 %v106, %v1605
    %1607 = vmatpush1.msra.mxu0 %v1606
    %1608 = vmatprep.subr.mxu0 0.0
    %v1609 = vand.u32 %v105, 4294901760
    %v1610 = vsub.f32 %v105, %v1609
    %1611 = vmatpush1.msra.mxu0 %v1610
    %1612 = vmatprep.subr.mxu0 0.0
    %v1613 = vand.u32 %v104, 4294901760
    %v1614 = vsub.f32 %v104, %v1613
    %1615 = vmatpush1.msra.mxu0 %v1614
    %1616 = vmatprep.subr.mxu0 0.0
    %v1617 = vand.u32 %v103, 4294901760
    %v1618 = vsub.f32 %v103, %v1617
    %1619 = vmatpush1.msra.mxu0 %v1618
    %1620 = vmatprep.subr.mxu0 0.0
    %v1621 = vand.u32 %v102, 4294901760
    %v1622 = vsub.f32 %v102, %v1621
    %1623 = vmatpush1.msra.mxu0 %v1622
    %1624 = vmatprep.subr.mxu0 0.0
    %v1625 = vand.u32 %v101, 4294901760
    %v1626 = vsub.f32 %v101, %v1625
    %1627 = vmatpush1.msra.mxu0 %v1626
    %1628 = vmatprep.subr.mxu0 0.0
    %v1629 = vand.u32 %v100, 4294901760
    %v1630 = vsub.f32 %v100, %v1629
    %1631 = vmatpush1.msra.mxu0 %v1630
    %1632 = vmatprep.subr.mxu0 0.0
    %v1633 = vand.u32 %v99, 4294901760
    %v1634 = vsub.f32 %v99, %v1633
    %1635 = vmatpush1.msra.mxu0 %v1634
    %1636 = vmatprep.subr.mxu0 0.0
    %v1637 = vand.u32 %v98, 4294901760
    %v1638 = vsub.f32 %v98, %v1637
    %1639 = vmatpush1.msra.mxu0 %v1638
    %1640 = vmatprep.subr.mxu0 0.0
    %v1641 = vand.u32 %v97, 4294901760
    %v1642 = vsub.f32 %v97, %v1641
    %1643 = vmatpush1.msra.mxu0 %v1642
    %1644 = vmatprep.subr.mxu0 0.0
    %v1645 = vand.u32 %v96, 4294901760
    %v1646 = vsub.f32 %v96, %v1645
    %1647 = vmatpush1.msra.mxu0 %v1646
    %1648 = vmatprep.subr.mxu0 0.0
    %v1649 = vand.u32 %v127, 4294901760
    %v1650 = vsub.f32 %v127, %v1649
    %1651 = vmatpush2.msra.mxu0 %v1650
    %1652 = vmatprep.subr.mxu0 0.0
    %v1653 = vand.u32 %v126, 4294901760
    %v1654 = vsub.f32 %v126, %v1653
    %1655 = vmatpush2.msra.mxu0 %v1654
    %1656 = vmatprep.subr.mxu0 0.0
    %v1657 = vand.u32 %v125, 4294901760
    %v1658 = vsub.f32 %v125, %v1657
    %1659 = vmatpush2.msra.mxu0 %v1658
    %1660 = vmatprep.subr.mxu0 0.0
    %v1661 = vand.u32 %v124, 4294901760
    %v1662 = vsub.f32 %v124, %v1661
    %1663 = vmatpush2.msra.mxu0 %v1662
    %1664 = vmatprep.subr.mxu0 0.0
    %v1665 = vand.u32 %v123, 4294901760
    %v1666 = vsub.f32 %v123, %v1665
    %1667 = vmatpush2.msra.mxu0 %v1666
    %1668 = vmatprep.subr.mxu0 0.0
    %v1669 = vand.u32 %v122, 4294901760
    %v1670 = vsub.f32 %v122, %v1669
    %1671 = vmatpush2.msra.mxu0 %v1670
    %1672 = vmatprep.subr.mxu0 0.0
    %v1673 = vand.u32 %v121, 4294901760
    %v1674 = vsub.f32 %v121, %v1673
    %1675 = vmatpush2.msra.mxu0 %v1674
    %1676 = vmatprep.subr.mxu0 0.0
    %v1677 = vand.u32 %v120, 4294901760
    %v1678 = vsub.f32 %v120, %v1677
    %1679 = vmatpush2.msra.mxu0 %v1678
    %1680 = vmatprep.subr.mxu0 0.0
    %v1681 = vand.u32 %v119, 4294901760
    %v1682 = vsub.f32 %v119, %v1681
    %1683 = vmatpush2.msra.mxu0 %v1682
    %1684 = vmatprep.subr.mxu0 0.0
    %v1685 = vand.u32 %v118, 4294901760
    %v1686 = vsub.f32 %v118, %v1685
    %1687 = vmatpush2.msra.mxu0 %v1686
    %1688 = vmatprep.subr.mxu0 0.0
    %v1689 = vand.u32 %v117, 4294901760
    %v1690 = vsub.f32 %v117, %v1689
    %1691 = vmatpush2.msra.mxu0 %v1690
    %1692 = vmatprep.subr.mxu0 0.0
    %v1693 = vand.u32 %v116, 4294901760
    %v1694 = vsub.f32 %v116, %v1693
    %1695 = vmatpush2.msra.mxu0 %v1694
    %1696 = vmatprep.subr.mxu0 0.0
    %v1697 = vand.u32 %v115, 4294901760
    %v1698 = vsub.f32 %v115, %v1697
    %1699 = vmatpush2.msra.mxu0 %v1698
    %1700 = vmatprep.subr.mxu0 0.0
    %v1701 = vand.u32 %v114, 4294901760
    %v1702 = vsub.f32 %v114, %v1701
    %1703 = vmatpush2.msra.mxu0 %v1702
    %1704 = vmatprep.subr.mxu0 0.0
    %v1705 = vand.u32 %v113, 4294901760
    %v1706 = vsub.f32 %v113, %v1705
    %1707 = vmatpush2.msra.mxu0 %v1706
    %1708 = vmatprep.subr.mxu0 0.0
    %v1709 = vand.u32 %v112, 4294901760
    %v1710 = vsub.f32 %v112, %v1709
    %1711 = vmatpush2.msra.mxu0 %v1710
    %v1712 = vand.u32 %v131, 4294901760
    %v1713 = vsub.f32 %v131, %v1712
    %1714 = vmatprep.mubr.f32.mxu0 %v1713
    %v1715 = vand.u32 %v130, 4294901760
    %v1716 = vsub.f32 %v130, %v1715
    %1717 = vmatmul.mubr.f32.gmra.mxu0 %v1716
    %v1718 = vpop.f32.mrf.mxu0
    %v1719 = vadd.f32 %v1560, %v1718
    %v1720 = vpop.f32.mrf.mxu0
    %v1721 = vand.u32 %v135, 4294901760
    %v1722 = vsub.f32 %v135, %v1721
    %1723 = vmatprep.mubr.f32.mxu0 %v1722
    %v1724 = vand.u32 %v134, 4294901760
    %v1725 = vsub.f32 %v134, %v1724
    %1726 = vmatmul.mubr.f32.gmra.mxu0 %v1725
    %v1727 = vpop.f32.mrf.mxu0
    %v1728 = vadd.f32 %v1567, %v1727
    %v1729 = vpop.f32.mrf.mxu0
    %v1730 = vand.u32 %v139, 4294901760
    %v1731 = vsub.f32 %v139, %v1730
    %1732 = vmatprep.mubr.f32.mxu0 %v1731
    %v1733 = vand.u32 %v138, 4294901760
    %v1734 = vsub.f32 %v138, %v1733
    %1735 = vmatmul.mubr.f32.gmra.mxu0 %v1734
    %v1736 = vpop.f32.mrf.mxu0
    %v1737 = vadd.f32 %v1574, %v1736
    %v1738 = vpop.f32.mrf.mxu0
    %v1739 = vand.u32 %v143, 4294901760
    %v1740 = vsub.f32 %v143, %v1739
    %1741 = vmatprep.mubr.f32.mxu0 %v1740
    %v1742 = vand.u32 %v142, 4294901760
    %v1743 = vsub.f32 %v142, %v1742
    %1744 = vmatmul.mubr.f32.gmra.mxu0 %v1743
    %v1745 = vpop.f32.mrf.mxu0
    %v1746 = vadd.f32 %v1581, %v1745
    %v1747 = vpop.f32.mrf.mxu0
    %1748 = vdwg.mxu0
    %1749 = vmatprep.subr.mxu0 0.0
    %v1750 = vand.u32 %v111, 4294901760
    %1751 = vmatpush1.msra.mxu0 %v1750
    %1752 = vmatprep.subr.mxu0 0.0
    %v1753 = vand.u32 %v110, 4294901760
    %1754 = vmatpush1.msra.mxu0 %v1753
    %1755 = vmatprep.subr.mxu0 0.0
    %v1756 = vand.u32 %v109, 4294901760
    %1757 = vmatpush1.msra.mxu0 %v1756
    %1758 = vmatprep.subr.mxu0 0.0
    %v1759 = vand.u32 %v108, 4294901760
    %1760 = vmatpush1.msra.mxu0 %v1759
    %1761 = vmatprep.subr.mxu0 0.0
    %v1762 = vand.u32 %v107, 4294901760
    %1763 = vmatpush1.msra.mxu0 %v1762
    %1764 = vmatprep.subr.mxu0 0.0
    %v1765 = vand.u32 %v106, 4294901760
    %1766 = vmatpush1.msra.mxu0 %v1765
    %1767 = vmatprep.subr.mxu0 0.0
    %v1768 = vand.u32 %v105, 4294901760
    %1769 = vmatpush1.msra.mxu0 %v1768
    %1770 = vmatprep.subr.mxu0 0.0
    %v1771 = vand.u32 %v104, 4294901760
    %1772 = vmatpush1.msra.mxu0 %v1771
    %1773 = vmatprep.subr.mxu0 0.0
    %v1774 = vand.u32 %v103, 4294901760
    %1775 = vmatpush1.msra.mxu0 %v1774
    %1776 = vmatprep.subr.mxu0 0.0
    %v1777 = vand.u32 %v102, 4294901760
    %1778 = vmatpush1.msra.mxu0 %v1777
    %1779 = vmatprep.subr.mxu0 0.0
    %v1780 = vand.u32 %v101, 4294901760
    %1781 = vmatpush1.msra.mxu0 %v1780
    %1782 = vmatprep.subr.mxu0 0.0
    %v1783 = vand.u32 %v100, 4294901760
    %1784 = vmatpush1.msra.mxu0 %v1783
    %1785 = vmatprep.subr.mxu0 0.0
    %v1786 = vand.u32 %v99, 4294901760
    %1787 = vmatpush1.msra.mxu0 %v1786
    %1788 = vmatprep.subr.mxu0 0.0
    %v1789 = vand.u32 %v98, 4294901760
    %1790 = vmatpush1.msra.mxu0 %v1789
    %1791 = vmatprep.subr.mxu0 0.0
    %v1792 = vand.u32 %v97, 4294901760
    %1793 = vmatpush1.msra.mxu0 %v1792
    %1794 = vmatprep.subr.mxu0 0.0
    %v1795 = vand.u32 %v96, 4294901760
    %1796 = vmatpush1.msra.mxu0 %v1795
    %1797 = vmatprep.subr.mxu0 0.0
    %v1798 = vand.u32 %v127, 4294901760
    %1799 = vmatpush2.msra.mxu0 %v1798
    %1800 = vmatprep.subr.mxu0 0.0
    %v1801 = vand.u32 %v126, 4294901760
    %1802 = vmatpush2.msra.mxu0 %v1801
    %1803 = vmatprep.subr.mxu0 0.0
    %v1804 = vand.u32 %v125, 4294901760
    %1805 = vmatpush2.msra.mxu0 %v1804
    %1806 = vmatprep.subr.mxu0 0.0
    %v1807 = vand.u32 %v124, 4294901760
    %1808 = vmatpush2.msra.mxu0 %v1807
    %1809 = vmatprep.subr.mxu0 0.0
    %v1810 = vand.u32 %v123, 4294901760
    %1811 = vmatpush2.msra.mxu0 %v1810
    %1812 = vmatprep.subr.mxu0 0.0
    %v1813 = vand.u32 %v122, 4294901760
    %1814 = vmatpush2.msra.mxu0 %v1813
    %1815 = vmatprep.subr.mxu0 0.0
    %v1816 = vand.u32 %v121, 4294901760
    %1817 = vmatpush2.msra.mxu0 %v1816
    %1818 = vmatprep.subr.mxu0 0.0
    %v1819 = vand.u32 %v120, 4294901760
    %1820 = vmatpush2.msra.mxu0 %v1819
    %1821 = vmatprep.subr.mxu0 0.0
    %v1822 = vand.u32 %v119, 4294901760
    %1823 = vmatpush2.msra.mxu0 %v1822
    %1824 = vmatprep.subr.mxu0 0.0
    %v1825 = vand.u32 %v118, 4294901760
    %1826 = vmatpush2.msra.mxu0 %v1825
    %1827 = vmatprep.subr.mxu0 0.0
    %v1828 = vand.u32 %v117, 4294901760
    %1829 = vmatpush2.msra.mxu0 %v1828
    %1830 = vmatprep.subr.mxu0 0.0
    %v1831 = vand.u32 %v116, 4294901760
    %1832 = vmatpush2.msra.mxu0 %v1831
    %1833 = vmatprep.subr.mxu0 0.0
    %v1834 = vand.u32 %v115, 4294901760
    %1835 = vmatpush2.msra.mxu0 %v1834
    %1836 = vmatprep.subr.mxu0 0.0
    %v1837 = vand.u32 %v114, 4294901760
    %1838 = vmatpush2.msra.mxu0 %v1837
    %1839 = vmatprep.subr.mxu0 0.0
    %v1840 = vand.u32 %v113, 4294901760
    %1841 = vmatpush2.msra.mxu0 %v1840
    %1842 = vmatprep.subr.mxu0 0.0
    %v1843 = vand.u32 %v112, 4294901760
    %1844 = vmatpush2.msra.mxu0 %v1843
    %v1845 = vand.u32 %v131, 4294901760
    %v1846 = vsub.f32 %v131, %v1845
    %v1847 = vand.u32 %v1846, 4294901760
    %1848 = vmatprep.mubr.f32.mxu0 %v1847
    %v1849 = vand.u32 %v130, 4294901760
    %v1850 = vsub.f32 %v130, %v1849
    %v1851 = vand.u32 %v1850, 4294901760
    %1852 = vmatmul.mubr.f32.gmra.mxu0 %v1851
    %v1853 = vpop.f32.mrf.mxu0
    %v1854 = vadd.f32 %v1719, %v1853
    %v1855 = vpop.f32.mrf.mxu0
    %v1856 = vand.u32 %v135, 4294901760
    %v1857 = vsub.f32 %v135, %v1856
    %v1858 = vand.u32 %v1857, 4294901760
    %1859 = vmatprep.mubr.f32.mxu0 %v1858
    %v1860 = vand.u32 %v134, 4294901760
    %v1861 = vsub.f32 %v134, %v1860
    %v1862 = vand.u32 %v1861, 4294901760
    %1863 = vmatmul.mubr.f32.gmra.mxu0 %v1862
    %v1864 = vpop.f32.mrf.mxu0
    %v1865 = vadd.f32 %v1728, %v1864
    %v1866 = vpop.f32.mrf.mxu0
    %v1867 = vand.u32 %v139, 4294901760
    %v1868 = vsub.f32 %v139, %v1867
    %v1869 = vand.u32 %v1868, 4294901760
    %1870 = vmatprep.mubr.f32.mxu0 %v1869
    %v1871 = vand.u32 %v138, 4294901760
    %v1872 = vsub.f32 %v138, %v1871
    %v1873 = vand.u32 %v1872, 4294901760
    %1874 = vmatmul.mubr.f32.gmra.mxu0 %v1873
    %v1875 = vpop.f32.mrf.mxu0
    %v1876 = vadd.f32 %v1737, %v1875
    %v1877 = vpop.f32.mrf.mxu0
    %v1878 = vand.u32 %v143, 4294901760
    %v1879 = vsub.f32 %v143, %v1878
    %v1880 = vand.u32 %v1879, 4294901760
    %1881 = vmatprep.mubr.f32.mxu0 %v1880
    %v1882 = vand.u32 %v142, 4294901760
    %v1883 = vsub.f32 %v142, %v1882
    %v1884 = vand.u32 %v1883, 4294901760
    %1885 = vmatmul.mubr.f32.gmra.mxu0 %v1884
    %v1886 = vpop.f32.mrf.mxu0
    %v1887 = vadd.f32 %v1746, %v1886
    %v1888 = vpop.f32.mrf.mxu0
    %1889 = vdwg.mxu0
    %1890 = vmatprep.subr.mxu0 0.0
    %v1891 = vand.u32 %v111, 4294901760
    %v1892 = vsub.f32 %v111, %v1891
    %v1893 = vand.u32 %v1892, 4294901760
    %1894 = vmatpush1.msra.mxu0 %v1893
    %1895 = vmatprep.subr.mxu0 0.0
    %v1896 = vand.u32 %v110, 4294901760
    %v1897 = vsub.f32 %v110, %v1896
    %v1898 = vand.u32 %v1897, 4294901760
    %1899 = vmatpush1.msra.mxu0 %v1898
    %1900 = vmatprep.subr.mxu0 0.0
    %v1901 = vand.u32 %v109, 4294901760
    %v1902 = vsub.f32 %v109, %v1901
    %v1903 = vand.u32 %v1902, 4294901760
    %1904 = vmatpush1.msra.mxu0 %v1903
    %1905 = vmatprep.subr.mxu0 0.0
    %v1906 = vand.u32 %v108, 4294901760
    %v1907 = vsub.f32 %v108, %v1906
    %v1908 = vand.u32 %v1907, 4294901760
    %1909 = vmatpush1.msra.mxu0 %v1908
    %1910 = vmatprep.subr.mxu0 0.0
    %v1911 = vand.u32 %v107, 4294901760
    %v1912 = vsub.f32 %v107, %v1911
    %v1913 = vand.u32 %v1912, 4294901760
    %1914 = vmatpush1.msra.mxu0 %v1913
    %1915 = vmatprep.subr.mxu0 0.0
    %v1916 = vand.u32 %v106, 4294901760
    %v1917 = vsub.f32 %v106, %v1916
    %v1918 = vand.u32 %v1917, 4294901760
    %1919 = vmatpush1.msra.mxu0 %v1918
    %1920 = vmatprep.subr.mxu0 0.0
    %v1921 = vand.u32 %v105, 4294901760
    %v1922 = vsub.f32 %v105, %v1921
    %v1923 = vand.u32 %v1922, 4294901760
    %1924 = vmatpush1.msra.mxu0 %v1923
    %1925 = vmatprep.subr.mxu0 0.0
    %v1926 = vand.u32 %v104, 4294901760
    %v1927 = vsub.f32 %v104, %v1926
    %v1928 = vand.u32 %v1927, 4294901760
    %1929 = vmatpush1.msra.mxu0 %v1928
    %1930 = vmatprep.subr.mxu0 0.0
    %v1931 = vand.u32 %v103, 4294901760
    %v1932 = vsub.f32 %v103, %v1931
    %v1933 = vand.u32 %v1932, 4294901760
    %1934 = vmatpush1.msra.mxu0 %v1933
    %1935 = vmatprep.subr.mxu0 0.0
    %v1936 = vand.u32 %v102, 4294901760
    %v1937 = vsub.f32 %v102, %v1936
    %v1938 = vand.u32 %v1937, 4294901760
    %1939 = vmatpush1.msra.mxu0 %v1938
    %1940 = vmatprep.subr.mxu0 0.0
    %v1941 = vand.u32 %v101, 4294901760
    %v1942 = vsub.f32 %v101, %v1941
    %v1943 = vand.u32 %v1942, 4294901760
    %1944 = vmatpush1.msra.mxu0 %v1943
    %1945 = vmatprep.subr.mxu0 0.0
    %v1946 = vand.u32 %v100, 4294901760
    %v1947 = vsub.f32 %v100, %v1946
    %v1948 = vand.u32 %v1947, 4294901760
    %1949 = vmatpush1.msra.mxu0 %v1948
    %1950 = vmatprep.subr.mxu0 0.0
    %v1951 = vand.u32 %v99, 4294901760
    %v1952 = vsub.f32 %v99, %v1951
    %v1953 = vand.u32 %v1952, 4294901760
    %1954 = vmatpush1.msra.mxu0 %v1953
    %1955 = vmatprep.subr.mxu0 0.0
    %v1956 = vand.u32 %v98, 4294901760
    %v1957 = vsub.f32 %v98, %v1956
    %v1958 = vand.u32 %v1957, 4294901760
    %1959 = vmatpush1.msra.mxu0 %v1958
    %1960 = vmatprep.subr.mxu0 0.0
    %v1961 = vand.u32 %v97, 4294901760
    %v1962 = vsub.f32 %v97, %v1961
    %v1963 = vand.u32 %v1962, 4294901760
    %1964 = vmatpush1.msra.mxu0 %v1963
    %1965 = vmatprep.subr.mxu0 0.0
    %v1966 = vand.u32 %v96, 4294901760
    %v1967 = vsub.f32 %v96, %v1966
    %v1968 = vand.u32 %v1967, 4294901760
    %1969 = vmatpush1.msra.mxu0 %v1968
    %1970 = vmatprep.subr.mxu0 0.0
    %v1971 = vand.u32 %v127, 4294901760
    %v1972 = vsub.f32 %v127, %v1971
    %v1973 = vand.u32 %v1972, 4294901760
    %1974 = vmatpush2.msra.mxu0 %v1973
    %1975 = vmatprep.subr.mxu0 0.0
    %v1976 = vand.u32 %v126, 4294901760
    %v1977 = vsub.f32 %v126, %v1976
    %v1978 = vand.u32 %v1977, 4294901760
    %1979 = vmatpush2.msra.mxu0 %v1978
    %1980 = vmatprep.subr.mxu0 0.0
    %v1981 = vand.u32 %v125, 4294901760
    %v1982 = vsub.f32 %v125, %v1981
    %v1983 = vand.u32 %v1982, 4294901760
    %1984 = vmatpush2.msra.mxu0 %v1983
    %1985 = vmatprep.subr.mxu0 0.0
    %v1986 = vand.u32 %v124, 4294901760
    %v1987 = vsub.f32 %v124, %v1986
    %v1988 = vand.u32 %v1987, 4294901760
    %1989 = vmatpush2.msra.mxu0 %v1988
    %1990 = vmatprep.subr.mxu0 0.0
    %v1991 = vand.u32 %v123, 4294901760
    %v1992 = vsub.f32 %v123, %v1991
    %v1993 = vand.u32 %v1992, 4294901760
    %1994 = vmatpush2.msra.mxu0 %v1993
    %1995 = vmatprep.subr.mxu0 0.0
    %v1996 = vand.u32 %v122, 4294901760
    %v1997 = vsub.f32 %v122, %v1996
    %v1998 = vand.u32 %v1997, 4294901760
    %1999 = vmatpush2.msra.mxu0 %v1998
    %2000 = vmatprep.subr.mxu0 0.0
    %v2001 = vand.u32 %v121, 4294901760
    %v2002 = vsub.f32 %v121, %v2001
    %v2003 = vand.u32 %v2002, 4294901760
    %2004 = vmatpush2.msra.mxu0 %v2003
    %2005 = vmatprep.subr.mxu0 0.0
    %v2006 = vand.u32 %v120, 4294901760
    %v2007 = vsub.f32 %v120, %v2006
    %v2008 = vand.u32 %v2007, 4294901760
    %2009 = vmatpush2.msra.mxu0 %v2008
    %2010 = vmatprep.subr.mxu0 0.0
    %v2011 = vand.u32 %v119, 4294901760
    %v2012 = vsub.f32 %v119, %v2011
    %v2013 = vand.u32 %v2012, 4294901760
    %2014 = vmatpush2.msra.mxu0 %v2013
    %2015 = vmatprep.subr.mxu0 0.0
    %v2016 = vand.u32 %v118, 4294901760
    %v2017 = vsub.f32 %v118, %v2016
    %v2018 = vand.u32 %v2017, 4294901760
    %2019 = vmatpush2.msra.mxu0 %v2018
    %2020 = vmatprep.subr.mxu0 0.0
    %v2021 = vand.u32 %v117, 4294901760
    %v2022 = vsub.f32 %v117, %v2021
    %v2023 = vand.u32 %v2022, 4294901760
    %2024 = vmatpush2.msra.mxu0 %v2023
    %2025 = vmatprep.subr.mxu0 0.0
    %v2026 = vand.u32 %v116, 4294901760
    %v2027 = vsub.f32 %v116, %v2026
    %v2028 = vand.u32 %v2027, 4294901760
    %2029 = vmatpush2.msra.mxu0 %v2028
    %2030 = vmatprep.subr.mxu0 0.0
    %v2031 = vand.u32 %v115, 4294901760
    %v2032 = vsub.f32 %v115, %v2031
    %v2033 = vand.u32 %v2032, 4294901760
    %2034 = vmatpush2.msra.mxu0 %v2033
    %2035 = vmatprep.subr.mxu0 0.0
    %v2036 = vand.u32 %v114, 4294901760
    %v2037 = vsub.f32 %v114, %v2036
    %v2038 = vand.u32 %v2037, 4294901760
    %2039 = vmatpush2.msra.mxu0 %v2038
    %2040 = vmatprep.subr.mxu0 0.0
    %v2041 = vand.u32 %v113, 4294901760
    %v2042 = vsub.f32 %v113, %v2041
    %v2043 = vand.u32 %v2042, 4294901760
    %2044 = vmatpush2.msra.mxu0 %v2043
    %2045 = vmatprep.subr.mxu0 0.0
    %v2046 = vand.u32 %v112, 4294901760
    %v2047 = vsub.f32 %v112, %v2046
    %v2048 = vand.u32 %v2047, 4294901760
    %2049 = vmatpush2.msra.mxu0 %v2048
    %v2050 = vand.u32 %v131, 4294901760
    %2051 = vmatprep.mubr.f32.mxu0 %v2050
    %v2052 = vand.u32 %v130, 4294901760
    %2053 = vmatmul.mubr.f32.gmra.mxu0 %v2052
    %v2054 = vpop.f32.mrf.mxu0
    %v2055 = vadd.f32 %v1854, %v2054
    %v2056 = vpop.f32.mrf.mxu0
    %v2057 = vand.u32 %v135, 4294901760
    %2058 = vmatprep.mubr.f32.mxu0 %v2057
    %v2059 = vand.u32 %v134, 4294901760
    %2060 = vmatmul.mubr.f32.gmra.mxu0 %v2059
    %v2061 = vpop.f32.mrf.mxu0
    %v2062 = vadd.f32 %v1865, %v2061
    %v2063 = vpop.f32.mrf.mxu0
    %v2064 = vand.u32 %v139, 4294901760
    %2065 = vmatprep.mubr.f32.mxu0 %v2064
    %v2066 = vand.u32 %v138, 4294901760
    %2067 = vmatmul.mubr.f32.gmra.mxu0 %v2066
    %v2068 = vpop.f32.mrf.mxu0
    %v2069 = vadd.f32 %v1876, %v2068
    %v2070 = vpop.f32.mrf.mxu0
    %v2071 = vand.u32 %v143, 4294901760
    %2072 = vmatprep.mubr.f32.mxu0 %v2071
    %v2073 = vand.u32 %v142, 4294901760
    %2074 = vmatmul.mubr.f32.gmra.mxu0 %v2073
    %v2075 = vpop.f32.mrf.mxu0
    %v2076 = vadd.f32 %v1887, %v2075
    %v2077 = vpop.f32.mrf.mxu0
    %2078 = vdwg.mxu0
    %2079 = vmatprep.subr.mxu0 0.0
    %v2080 = vand.u32 %v111, 4294901760
    %2081 = vmatpush1.msra.mxu0 %v2080
    %2082 = vmatprep.subr.mxu0 0.0
    %v2083 = vand.u32 %v110, 4294901760
    %2084 = vmatpush1.msra.mxu0 %v2083
    %2085 = vmatprep.subr.mxu0 0.0
    %v2086 = vand.u32 %v109, 4294901760
    %2087 = vmatpush1.msra.mxu0 %v2086
    %2088 = vmatprep.subr.mxu0 0.0
    %v2089 = vand.u32 %v108, 4294901760
    %2090 = vmatpush1.msra.mxu0 %v2089
    %2091 = vmatprep.subr.mxu0 0.0
    %v2092 = vand.u32 %v107, 4294901760
    %2093 = vmatpush1.msra.mxu0 %v2092
    %2094 = vmatprep.subr.mxu0 0.0
    %v2095 = vand.u32 %v106, 4294901760
    %2096 = vmatpush1.msra.mxu0 %v2095
    %2097 = vmatprep.subr.mxu0 0.0
    %v2098 = vand.u32 %v105, 4294901760
    %2099 = vmatpush1.msra.mxu0 %v2098
    %2100 = vmatprep.subr.mxu0 0.0
    %v2101 = vand.u32 %v104, 4294901760
    %2102 = vmatpush1.msra.mxu0 %v2101
    %2103 = vmatprep.subr.mxu0 0.0
    %v2104 = vand.u32 %v103, 4294901760
    %2105 = vmatpush1.msra.mxu0 %v2104
    %2106 = vmatprep.subr.mxu0 0.0
    %v2107 = vand.u32 %v102, 4294901760
    %2108 = vmatpush1.msra.mxu0 %v2107
    %2109 = vmatprep.subr.mxu0 0.0
    %v2110 = vand.u32 %v101, 4294901760
    %2111 = vmatpush1.msra.mxu0 %v2110
    %2112 = vmatprep.subr.mxu0 0.0
    %v2113 = vand.u32 %v100, 4294901760
    %2114 = vmatpush1.msra.mxu0 %v2113
    %2115 = vmatprep.subr.mxu0 0.0
    %v2116 = vand.u32 %v99, 4294901760
    %2117 = vmatpush1.msra.mxu0 %v2116
    %2118 = vmatprep.subr.mxu0 0.0
    %v2119 = vand.u32 %v98, 4294901760
    %2120 = vmatpush1.msra.mxu0 %v2119
    %2121 = vmatprep.subr.mxu0 0.0
    %v2122 = vand.u32 %v97, 4294901760
    %2123 = vmatpush1.msra.mxu0 %v2122
    %2124 = vmatprep.subr.mxu0 0.0
    %v2125 = vand.u32 %v96, 4294901760
    %2126 = vmatpush1.msra.mxu0 %v2125
    %2127 = vmatprep.subr.mxu0 0.0
    %v2128 = vand.u32 %v127, 4294901760
    %2129 = vmatpush2.msra.mxu0 %v2128
    %2130 = vmatprep.subr.mxu0 0.0
    %v2131 = vand.u32 %v126, 4294901760
    %2132 = vmatpush2.msra.mxu0 %v2131
    %2133 = vmatprep.subr.mxu0 0.0
    %v2134 = vand.u32 %v125, 4294901760
    %2135 = vmatpush2.msra.mxu0 %v2134
    %2136 = vmatprep.subr.mxu0 0.0
    %v2137 = vand.u32 %v124, 4294901760
    %2138 = vmatpush2.msra.mxu0 %v2137
    %2139 = vmatprep.subr.mxu0 0.0
    %v2140 = vand.u32 %v123, 4294901760
    %2141 = vmatpush2.msra.mxu0 %v2140
    %2142 = vmatprep.subr.mxu0 0.0
    %v2143 = vand.u32 %v122, 4294901760
    %2144 = vmatpush2.msra.mxu0 %v2143
    %2145 = vmatprep.subr.mxu0 0.0
    %v2146 = vand.u32 %v121, 4294901760
    %2147 = vmatpush2.msra.mxu0 %v2146
    %2148 = vmatprep.subr.mxu0 0.0
    %v2149 = vand.u32 %v120, 4294901760
    %2150 = vmatpush2.msra.mxu0 %v2149
    %2151 = vmatprep.subr.mxu0 0.0
    %v2152 = vand.u32 %v119, 4294901760
    %2153 = vmatpush2.msra.mxu0 %v2152
    %2154 = vmatprep.subr.mxu0 0.0
    %v2155 = vand.u32 %v118, 4294901760
    %2156 = vmatpush2.msra.mxu0 %v2155
    %2157 = vmatprep.subr.mxu0 0.0
    %v2158 = vand.u32 %v117, 4294901760
    %2159 = vmatpush2.msra.mxu0 %v2158
    %2160 = vmatprep.subr.mxu0 0.0
    %v2161 = vand.u32 %v116, 4294901760
    %2162 = vmatpush2.msra.mxu0 %v2161
    %2163 = vmatprep.subr.mxu0 0.0
    %v2164 = vand.u32 %v115, 4294901760
    %2165 = vmatpush2.msra.mxu0 %v2164
    %2166 = vmatprep.subr.mxu0 0.0
    %v2167 = vand.u32 %v114, 4294901760
    %2168 = vmatpush2.msra.mxu0 %v2167
    %2169 = vmatprep.subr.mxu0 0.0
    %v2170 = vand.u32 %v113, 4294901760
    %2171 = vmatpush2.msra.mxu0 %v2170
    %2172 = vmatprep.subr.mxu0 0.0
    %v2173 = vand.u32 %v112, 4294901760
    %2174 = vmatpush2.msra.mxu0 %v2173
    %v2175 = vand.u32 %v131, 4294901760
    %2176 = vmatprep.mubr.f32.mxu0 %v2175
    %v2177 = vand.u32 %v130, 4294901760
    %2178 = vmatmul.mubr.f32.gmra.mxu0 %v2177
    %v2179 = vpop.f32.mrf.mxu0
    %v2180 = vadd.f32 %v2055, %v2179
    %v2181 = vpop.f32.mrf.mxu0
    %v2182 = vand.u32 %v135, 4294901760
    %2183 = vmatprep.mubr.f32.mxu0 %v2182
    %v2184 = vand.u32 %v134, 4294901760
    %2185 = vmatmul.mubr.f32.gmra.mxu0 %v2184
    %v2186 = vpop.f32.mrf.mxu0
    %v2187 = vadd.f32 %v2062, %v2186
    %v2188 = vpop.f32.mrf.mxu0
    %v2189 = vand.u32 %v139, 4294901760
    %2190 = vmatprep.mubr.f32.mxu0 %v2189
    %v2191 = vand.u32 %v138, 4294901760
    %2192 = vmatmul.mubr.f32.gmra.mxu0 %v2191
    %v2193 = vpop.f32.mrf.mxu0
    %v2194 = vadd.f32 %v2069, %v2193
    %v2195 = vpop.f32.mrf.mxu0
    %v2196 = vand.u32 %v143, 4294901760
    %2197 = vmatprep.mubr.f32.mxu0 %v2196
    %v2198 = vand.u32 %v142, 4294901760
    %2199 = vmatmul.mubr.f32.gmra.mxu0 %v2198
    %v2200 = vpop.f32.mrf.mxu0
    %v2201 = vadd.f32 %v2076, %v2200
    %v2202 = vpop.f32.mrf.mxu0
    %2203 = vdwg.mxu0
    %2204 = vxpose.xlu0.b32.start [1/16] %v2180, 128
    %2205 = vxpose.xlu0.b32.cont [2/16] %v2187, 128
    %2206 = vxpose.xlu0.b32.cont [3/16] 0.0, 128
    %2207 = vxpose.xlu0.b32.cont [4/16] 0.0, 128
    %2208 = vxpose.xlu0.b32.cont [5/16] 0.0, 128
    %2209 = vxpose.xlu0.b32.cont [6/16] 0.0, 128
    %2210 = vxpose.xlu0.b32.cont [7/16] 0.0, 128
    %2211 = vxpose.xlu0.b32.cont [8/16] 0.0, 128
    %2212 = vxpose.xlu0.b32.cont [9/16] 0.0, 128
    %2213 = vxpose.xlu0.b32.cont [10/16] 0.0, 128
    %2214 = vxpose.xlu0.b32.cont [11/16] 0.0, 128
    %2215 = vxpose.xlu0.b32.cont [12/16] 0.0, 128
    %2216 = vxpose.xlu0.b32.cont [13/16] 0.0, 128
    %2217 = vxpose.xlu0.b32.cont [14/16] 0.0, 128
    %2218 = vxpose.xlu0.b32.cont [15/16] 0.0, 128
    %2219 = vxpose.xlu0.b32.end [16/16] 0.0, 128
    %v2220 = vpop.trf.xlu0
    %v2221 = vpop.trf.xlu0
    %v2222 = vpop.trf.xlu0
    %v2223 = vpop.trf.xlu0
    %v2224 = vpop.trf.xlu0
    %v2225 = vpop.trf.xlu0
    %v2226 = vpop.trf.xlu0
    %v2227 = vpop.trf.xlu0
    %v2228 = vpop.trf.xlu0
    %v2229 = vpop.trf.xlu0
    %v2230 = vpop.trf.xlu0
    %v2231 = vpop.trf.xlu0
    %v2232 = vpop.trf.xlu0
    %v2233 = vpop.trf.xlu0
    %v2234 = vpop.trf.xlu0
    %v2235 = vpop.trf.xlu0
    %vm2236 = vcmask 97280
    %2237 = vst.msk [vmem:[%s2] sm:$0xff] %vm2236, %v2220
    %2238 = vst.msk [vmem:[%s2 + $0x8] sm:$0xff] %vm2236, %v2221
    %2239 = vst.msk [vmem:[%s2 + $0x10] sm:$0xff] %vm2236, %v2222
    %2240 = vst.msk [vmem:[%s2 + $0x18] sm:$0xff] %vm2236, %v2223
    %2241 = vst.msk [vmem:[%s2 + $0x20] sm:$0xff] %vm2236, %v2224
    %2242 = vst.msk [vmem:[%s2 + $0x28] sm:$0xff] %vm2236, %v2225
    %2243 = vst.msk [vmem:[%s2 + $0x30] sm:$0xff] %vm2236, %v2226
    %2244 = vst.msk [vmem:[%s2 + $0x38] sm:$0xff] %vm2236, %v2227
    %2245 = vst.msk [vmem:[%s2 + $0x40] sm:$0xff] %vm2236, %v2228
    %2246 = vst.msk [vmem:[%s2 + $0x48] sm:$0xff] %vm2236, %v2229
    %2247 = vst.msk [vmem:[%s2 + $0x50] sm:$0xff] %vm2236, %v2230
    %2248 = vst.msk [vmem:[%s2 + $0x58] sm:$0xff] %vm2236, %v2231
    %2249 = vst.msk [vmem:[%s2 + $0x60] sm:$0xff] %vm2236, %v2232
    %2250 = vst.msk [vmem:[%s2 + $0x68] sm:$0xff] %vm2236, %v2233
    %2251 = vst.msk [vmem:[%s2 + $0x70] sm:$0xff] %vm2236, %v2234
    %2252 = vst.msk [vmem:[%s2 + $0x78] sm:$0xff] %vm2236, %v2235
    %2253 = vxpose.xlu0.b32.start [1/16] %v2194, 128
    %2254 = vxpose.xlu0.b32.cont [2/16] %v2201, 128
    %2255 = vxpose.xlu0.b32.cont [3/16] 0.0, 128
    %2256 = vxpose.xlu0.b32.cont [4/16] 0.0, 128
    %2257 = vxpose.xlu0.b32.cont [5/16] 0.0, 128
    %2258 = vxpose.xlu0.b32.cont [6/16] 0.0, 128
    %2259 = vxpose.xlu0.b32.cont [7/16] 0.0, 128
    %2260 = vxpose.xlu0.b32.cont [8/16] 0.0, 128
    %2261 = vxpose.xlu0.b32.cont [9/16] 0.0, 128
    %2262 = vxpose.xlu0.b32.cont [10/16] 0.0, 128
    %2263 = vxpose.xlu0.b32.cont [11/16] 0.0, 128
    %2264 = vxpose.xlu0.b32.cont [12/16] 0.0, 128
    %2265 = vxpose.xlu0.b32.cont [13/16] 0.0, 128
    %2266 = vxpose.xlu0.b32.cont [14/16] 0.0, 128
    %2267 = vxpose.xlu0.b32.cont [15/16] 0.0, 128
    %2268 = vxpose.xlu0.b32.end [16/16] 0.0, 128
    %v2269 = vpop.trf.xlu0
    %v2270 = vpop.trf.xlu0
    %v2271 = vpop.trf.xlu0
    %v2272 = vpop.trf.xlu0
    %v2273 = vpop.trf.xlu0
    %v2274 = vpop.trf.xlu0
    %v2275 = vpop.trf.xlu0
    %v2276 = vpop.trf.xlu0
    %v2277 = vpop.trf.xlu0
    %v2278 = vpop.trf.xlu0
    %v2279 = vpop.trf.xlu0
    %v2280 = vpop.trf.xlu0
    %v2281 = vpop.trf.xlu0
    %v2282 = vpop.trf.xlu0
    %v2283 = vpop.trf.xlu0
    %v2284 = vpop.trf.xlu0
    %s2285 = scalar_lea.vmem %s2, 128
    %2286 = vst.msk [vmem:[%s2285] sm:$0xff] %vm2236, %v2269
    %2287 = vst.msk [vmem:[%s2285 + $0x8] sm:$0xff] %vm2236, %v2270
    %2288 = vst.msk [vmem:[%s2285 + $0x10] sm:$0xff] %vm2236, %v2271
    %2289 = vst.msk [vmem:[%s2285 + $0x18] sm:$0xff] %vm2236, %v2272
    %2290 = vst.msk [vmem:[%s2285 + $0x20] sm:$0xff] %vm2236, %v2273
    %2291 = vst.msk [vmem:[%s2285 + $0x28] sm:$0xff] %vm2236, %v2274
    %2292 = vst.msk [vmem:[%s2285 + $0x30] sm:$0xff] %vm2236, %v2275
    %2293 = vst.msk [vmem:[%s2285 + $0x38] sm:$0xff] %vm2236, %v2276
    %2294 = vst.msk [vmem:[%s2285 + $0x40] sm:$0xff] %vm2236, %v2277
    %2295 = vst.msk [vmem:[%s2285 + $0x48] sm:$0xff] %vm2236, %v2278
    %2296 = vst.msk [vmem:[%s2285 + $0x50] sm:$0xff] %vm2236, %v2279
    %2297 = vst.msk [vmem:[%s2285 + $0x58] sm:$0xff] %vm2236, %v2280
    %2298 = vst.msk [vmem:[%s2285 + $0x60] sm:$0xff] %vm2236, %v2281
    %2299 = vst.msk [vmem:[%s2285 + $0x68] sm:$0xff] %vm2236, %v2282
    %2300 = vst.msk [vmem:[%s2285 + $0x70] sm:$0xff] %vm2236, %v2283
    %2301 = vst.msk [vmem:[%s2285 + $0x78] sm:$0xff] %vm2236, %v2284
    // Predicated region
    $region18: #{tpu_custom_call.1} parent=1 // pred_check
      _
    $region19: #{tpu_custom_call.1} parent=1 // pred_check_branch
      %2303 = sbr.rel (0) target = $region21
    $region20: #{tpu_custom_call.1} parent=1 // pred_region
      _
    $region21: #{tpu_custom_call.1} parent=1 // pred_fallthru
      _
    // Predicated region
    $region22: #{tpu_custom_call.1} parent=1 // pred_check
      _
    $region23: #{tpu_custom_call.1} parent=1 // pred_check_branch
      %2305 = sbr.rel (0) target = $region25
    $region24: #{tpu_custom_call.1} parent=1 // pred_region
      _
    $region25: #{tpu_custom_call.1} parent=1 // pred_fallthru
      _
    %2306 = vsyncpa [#allocation3], 1
    %2307 = vsyncpa [#allocation5], 1

</llo_original>
